<compile_context>
chip_gen: v7x
topology: tpu7x:2x2x1
jax: 0.10.0
libtpu: 0.0.40
codegen_flags: <defaults>
</compile_context>

<pallas_src>
import functools

import jax
import jax.numpy as jnp
from jax.experimental import pallas as pl
from jax.experimental.pallas import tpu as pltpu


def _attn_kernel(x_ref, w_ref, o_ref, *, num_heads, approx_softmax):
    # x_ref : (1, N, C)   this batch element's activations
    # w_ref : (C, 3C)     fused [Wq^T | Wk^T | Wv^T]  (grid-invariant)
    # o_ref : (1, N, C)   lane-dense output slab
    x = x_ref[0]                                   # (N, C)
    w = w_ref[...]                                 # (C, 3C)
    N, C = x.shape
    H = num_heads
    Dh = C // H

    # Fused QKV projection: one full-width MXU matmul per batch element.
    qkv = jnp.dot(x, w, preferred_element_type=jnp.float32)        # (N, 3C)

    # Heads-batched layout (H, N, Dh): one reshape+transpose per operand
    # instead of H per-head 16-lane slices.
    q = jnp.transpose(qkv[:, 0 * C:1 * C].reshape(N, H, Dh), (1, 0, 2))
    k = jnp.transpose(qkv[:, 1 * C:2 * C].reshape(N, H, Dh), (1, 0, 2))
    v = jnp.transpose(qkv[:, 2 * C:3 * C].reshape(N, H, Dh), (1, 0, 2))

    # scores = q @ k^T for ALL heads in one batched dot_general.
    # NOTE: deliberately NO 1/sqrt(head_dim) scaling (matches the baseline).
    s = jnp.einsum("hnd,hmd->hnm", q, k,
                   preferred_element_type=jnp.float32)             # (H, N, N)

    # Numerically-stable softmax along the key axis.
    m = jnp.max(s, axis=-1, keepdims=True)
    e = jnp.exp(s - m)
    denom = jnp.sum(e, axis=-1, keepdims=True)
    if approx_softmax:
        p = e * pl.reciprocal(denom, approx=True)   # EUP slot, ~2^-12 rel err
    else:
        p = e / denom                               # exact (default)

    # attention output for ALL heads in one batched dot_general.
    o = jnp.einsum("hnm,hmd->hnd", p, v,
                   preferred_element_type=jnp.float32)             # (H, N, Dh)

    # (H, N, Dh) -> (N, C): one lane-dense store.
    o_ref[0] = jnp.transpose(o, (1, 0, 2)).reshape(N, C).astype(o_ref.dtype)


def attn_baseline(x, w_qkv, num_heads, *, approx_softmax=False):
    """x: (B, N, C); w_qkv: (C, 3C) = concat([Wq^T, Wk^T, Wv^T], axis=1)."""
    B, N, C = x.shape
    assert w_qkv.shape == (C, 3 * C)
    assert C % num_heads == 0

    kernel = functools.partial(
        _attn_kernel, num_heads=num_heads, approx_softmax=approx_softmax)

    # Rough per-step VMEM footprint (f32): double-buffered x/out blocks,
    # double-buffered weight, qkv, scores + exp, attention output temporaries.
    f32 = 4
    est = f32 * (4 * N * C                 # x + out blocks, double-buffered
                 + 2 * C * 3 * C           # weight, double-buffered
                 + N * 3 * C               # qkv
                 + 2 * num_heads * N * N   # scores + exp(scores)
                 + 2 * N * C)              # per-head outputs + final slab
    vmem_limit = int(min(max(2 * est, 32 * 1024 * 1024), 64 * 1024 * 1024))

    cost = pl.CostEstimate(
        flops=B * (6 * N * C * C + 4 * N * N * C),
        transcendentals=B * num_heads * N * N,
        bytes_accessed=4 * (B * N * C + C * 3 * C + B * N * C),
    )

    return pl.pallas_call(
        kernel,
        out_shape=jax.ShapeDtypeStruct((B, N, C), x.dtype),
        grid_spec=pltpu.PrefetchScalarGridSpec(
            num_scalar_prefetch=0,
            grid=(B,),
            in_specs=[
                pl.BlockSpec((1, N, C), lambda b: (b, 0, 0)),
                pl.BlockSpec((C, 3 * C), lambda b: (0, 0)),
            ],
            out_specs=pl.BlockSpec((1, N, C), lambda b: (b, 0, 0)),
        ),
        compiler_params=pltpu.CompilerParams(
            dimension_semantics=("parallel",),   # v7x: one batch per TensorCore
            vmem_limit_bytes=vmem_limit,
        ),
        cost_estimate=cost,
    )(x, w_qkv)


def _reference(x, w_qkv, num_heads):
    # Pure-JAX reference matching the PyTorch forward, computed at HIGHEST
    # matmul precision so it is comparable to the f32 kernel.
    B, N, C = x.shape
    Dh = C // num_heads
    hp = jax.lax.Precision.HIGHEST

    qkv = jnp.dot(x, w_qkv, precision=hp)                      # (B, N, 3C)
    q, k, v = jnp.split(qkv, 3, axis=-1)

    def to_heads(t):
        return t.reshape(B, N, num_heads, Dh).transpose(0, 2, 1, 3)

    q, k, v = map(to_heads, (q, k, v))
    s = jnp.einsum("bhnd,bhmd->bhnm", q, k, precision=hp)      # no scaling
    p = jax.nn.softmax(s, axis=-1)
    o = jnp.einsum("bhnm,bhmd->bhnd", p, v, precision=hp)
    return o.transpose(0, 2, 1, 3).reshape(B, N, C)


if __name__ == "__main__":
    # Small shapes consistent with the module defaults: dim=128, local_heads=8.
    B, N, C = 2, 8, 128
    H = 8

    key = jax.random.PRNGKey(0)
    kx, kq, kk, kv = jax.random.split(key, 4)

    x = jax.random.normal(kx, (B, N, C), dtype=jnp.float32)

    # PyTorch Linear weight is (out, in); the forward computes x @ W^T, so we
    # store W^T and fuse Q/K/V along columns.
    scale = 1.0 / jnp.sqrt(jnp.float32(C))
    wq = jax.random.uniform(kq, (C, C), dtype=jnp.float32, minval=-1, maxval=1) * scale
    wk = jax.random.uniform(kk, (C, C), dtype=jnp.float32, minval=-1, maxval=1) * scale
    wv = jax.random.uniform(kv, (C, C), dtype=jnp.float32, minval=-1, maxval=1) * scale
    w_qkv = jnp.concatenate([wq.T, wk.T, wv.T], axis=1)        # (C, 3C)

    out = attn_baseline(x, w_qkv, H)
    out = jax.block_until_ready(out)

    ref = _reference(x, w_qkv, H)
    assert out.shape == (B, N, C)
    err = jnp.max(jnp.abs(out - ref))
    assert jnp.allclose(out, ref, atol=5e-3, rtol=5e-3), f"mismatch vs reference (max abs err {err})"

    print("KERNEL_OK")
</pallas_src>

<mosaic_0001>
module attributes {stable_mosaic.version = 11 : i64} {
  func.func @_attn_kernel(%arg0: i32, %arg1: memref<1x8x128xf32, #tpu.memory_space<vmem>>, %arg2: memref<128x384xf32, #tpu.memory_space<vmem>>, %arg3: memref<1x8x128xf32, #tpu.memory_space<vmem>>) attributes {dimension_semantics = [#tpu.dimension_semantics<parallel>], iteration_bounds = array<i64: 2>, scalar_prefetch = 0 : i64, scratch_operands = 0 : i64, tpu.core_type = #tpu.core_type<tc>, window_params = [{transform_indices = @transform_0, window_bounds = array<i64: 1, 8, 128>}, {pipeline_mode = #tpu.pipeline_mode<synchronous>, transform_indices = @transform_1, window_bounds = array<i64: 128, 384>}, {transform_indices = @transform_2, window_bounds = array<i64: 1, 8, 128>}]} {
    %c0 = arith.constant 0 : index
    %c0_0 = arith.constant 0 : index
    %c0_1 = arith.constant 0 : index
    %0 = vector.load %arg1[%c0, %c0_0, %c0_1] : memref<1x8x128xf32, #tpu.memory_space<vmem>>, vector<1x8x128xf32>
    %1 = vector.shape_cast %0 : vector<1x8x128xf32> to vector<8x128xf32>
    %c0_2 = arith.constant 0 : index
    %c0_3 = arith.constant 0 : index
    %2 = vector.load %arg2[%c0_2, %c0_3] : memref<128x384xf32, #tpu.memory_space<vmem>>, vector<128x384xf32>
    %cst = arith.constant dense<0.000000e+00> : vector<8x384xf32>
    %3 = tpu.matmul %1, %2, %cst {dimension_numbers = #tpu.dot_dimension_numbers<[1], [0], [0], [1], [0, 0, 1, 1], [], []>} : vector<8x128xf32>, vector<128x384xf32>, vector<8x384xf32> -> vector<8x384xf32>
    %4 = vector.extract_strided_slice %3 {offsets = [0, 0], sizes = [8, 128], strides = [1, 1]} : vector<8x384xf32> to vector<8x128xf32>
    %5 = vector.shape_cast %4 : vector<8x128xf32> to vector<8x8x16xf32>
    %6 = tpu.transpose %5, [1, 0, 2] : vector<8x8x16xf32> -> vector<8x8x16xf32>
    %7 = vector.extract_strided_slice %3 {offsets = [0, 128], sizes = [8, 128], strides = [1, 1]} : vector<8x384xf32> to vector<8x128xf32>
    %8 = vector.shape_cast %7 : vector<8x128xf32> to vector<8x8x16xf32>
    %9 = tpu.transpose %8, [1, 0, 2] : vector<8x8x16xf32> -> vector<8x8x16xf32>
    %10 = vector.extract_strided_slice %3 {offsets = [0, 256], sizes = [8, 128], strides = [1, 1]} : vector<8x384xf32> to vector<8x128xf32>
    %11 = vector.shape_cast %10 : vector<8x128xf32> to vector<8x8x16xf32>
    %12 = tpu.transpose %11, [1, 0, 2] : vector<8x8x16xf32> -> vector<8x8x16xf32>
    "tpu.trace_start"() <{level = 10 : i32, message = "hnd,hmd->hnm"}> : () -> ()
    %cst_4 = arith.constant dense<0.000000e+00> : vector<8x8x8xf32>
    %13 = tpu.matmul %6, %9, %cst_4 {dimension_numbers = #tpu.dot_dimension_numbers<[2], [2], [1], [1], [0, 0, 0, 1, 1, 1], [0], [0]>} : vector<8x8x16xf32>, vector<8x8x16xf32>, vector<8x8x8xf32> -> vector<8x8x8xf32>
    "tpu.trace_stop"() : () -> ()
    %cst_5 = arith.constant dense<0xFF800000> : vector<8x8xf32>
    %14 = vector.multi_reduction <maximumf>, %13, %cst_5 [2] : vector<8x8x8xf32> to vector<8x8xf32>
    %15 = vector.shape_cast %14 : vector<8x8xf32> to vector<8x8x1xf32>
    %16 = vector.broadcast %15 : vector<8x8x1xf32> to vector<8x8x8xf32>
    %17 = arith.subf %13, %16 : vector<8x8x8xf32>
    %18 = math.exp %17 : vector<8x8x8xf32>
    %cst_6 = arith.constant dense<0.000000e+00> : vector<8x8xf32>
    %19 = vector.multi_reduction <add>, %18, %cst_6 [2] : vector<8x8x8xf32> to vector<8x8xf32>
    %20 = vector.shape_cast %19 : vector<8x8xf32> to vector<8x8x1xf32>
    %21 = vector.broadcast %20 : vector<8x8x1xf32> to vector<8x8x8xf32>
    %22 = arith.divf %18, %21 : vector<8x8x8xf32>
    "tpu.trace_start"() <{level = 10 : i32, message = "hnm,hmd->hnd"}> : () -> ()
    %cst_7 = arith.constant dense<0.000000e+00> : vector<8x8x16xf32>
    %23 = tpu.matmul %22, %12, %cst_7 {dimension_numbers = #tpu.dot_dimension_numbers<[2], [1], [1], [2], [0, 0, 0, 1, 1, 2], [0], [0]>} : vector<8x8x8xf32>, vector<8x8x16xf32>, vector<8x8x16xf32> -> vector<8x8x16xf32>
    "tpu.trace_stop"() : () -> ()
    %24 = tpu.transpose %23, [1, 0, 2] : vector<8x8x16xf32> -> vector<8x8x16xf32>
    %25 = vector.shape_cast %24 : vector<8x8x16xf32> to vector<8x128xf32>
    %c0_8 = arith.constant 0 : index
    %c0_9 = arith.constant 0 : index
    %c0_10 = arith.constant 0 : index
    %26 = vector.load %arg3[%c0_8, %c0_9, %c0_10] : memref<1x8x128xf32, #tpu.memory_space<vmem>>, vector<1x8x128xf32>
    %27 = vector.shape_cast %26 : vector<1x8x128xf32> to vector<8x128xf32>
    %28 = vector.shape_cast %25 : vector<8x128xf32> to vector<1x8x128xf32>
    tpu.vector_store %arg3[%c0_8, %c0_9, %c0_10], %28 {strides = array<i32>} : memref<1x8x128xf32, #tpu.memory_space<vmem>>, vector<1x8x128xf32>,
    return
  }
  func.func @transform_0(%arg0: i32) -> (i32, i32, i32) {
    %c0_i32 = arith.constant 0 : i32
    %c0_i32_0 = arith.constant 0 : i32
    %c0_i32_1 = arith.constant 0 : i32
    return %arg0, %c0_i32, %c0_i32_0 : i32, i32, i32
  }
  func.func @transform_1(%arg0: i32) -> (i32, i32) {
    %c0_i32 = arith.constant 0 : i32
    %c0_i32_0 = arith.constant 0 : i32
    %c0_i32_1 = arith.constant 0 : i32
    return %c0_i32, %c0_i32_0 : i32, i32
  }
  func.func @transform_2(%arg0: i32) -> (i32, i32, i32) {
    %c0_i32 = arith.constant 0 : i32
    %c0_i32_0 = arith.constant 0 : i32
    %c0_i32_1 = arith.constant 0 : i32
    return %arg0, %c0_i32, %c0_i32_0 : i32, i32, i32
  }
}

</mosaic_0001>

<llo_original>
// kernel: tpu_custom_call.1
$region0: #{tpu_custom_call.1}
  #allocation0 [shape = 'u32[]', space=smem, size = 0x4, offset = 0x4, fixed_abs, tag = 'smem constant byte address 0x4 - core index']
  #allocation1 [shape = 'u32[144,128]{1,0:T(1,128)}', space=vmem, size = 0x12000, scoped, tag = 'internal scratch']
  %s0 = inlined_call_operand.hbm [shape: f32[2,8,128], index: 0, kind: input, shape index: {}]
  %s1 = inlined_call_operand.hbm [shape: f32[128,384], index: 1, kind: input, shape index: {}]
  %s2 = inlined_call_operand.hbm [shape: f32[2,8,128], index: 2, kind: output, shape index: {}]
  %s3 = sld [smem:[#allocation0]]
  $region49: #{tpu_custom_call.1} parent=0
    _
  %s5 = ssub.s32 1, %s3
  %s6 = scalar_select 0, %s5, %s3
  $region1: #{tpu_custom_call.1} parent=0
    #allocation2 [shape = 'u8[8192]{0}', space=vmem, size = 0x2000, scoped, tag = 'input window, operand 0']
    #allocation3 [shape = 's32[2]{0}', space=sflag, size = 0x8, scoped, tag = 'scoped memory for tpu_custom_call.1']
    #allocation4 [shape = 's32[2]{0}', space=sflag, size = 0x8, scoped, tag = 'scoped memory for tpu_custom_call.1']
    #allocation5 [shape = 'u8[196608]{0}', space=vmem, size = 0x30000, scoped, tag = 'input window, operand 1, single buffered']
    #allocation6 [shape = 's32[1]{0}', space=sflag, size = 0x4, scoped, tag = 'scoped memory for tpu_custom_call.1']
    #allocation7 [shape = 'u8[8192]{0}', space=vmem, size = 0x2000, scoped, tag = 'output window, operand 0']
    %7 = vsyncpa [#allocation3], 0
    %s8 = scalar_lea.sflag [#allocation3], 1
    %9 = vsyncpa %s8, 0
    %10 = vsyncpa [#allocation6], 0
    %11 = vsyncpa [#allocation4], 0
    %s12 = scalar_lea.sflag [#allocation4], 1
    %13 = vsyncpa %s12, 0
    loop: start=0, step=1, limit=4
    $region2: #{tpu_custom_call.1} parent=1 // loop_pre_header
      _
    $region3: #{tpu_custom_call.1} parent=1 // loop_header
      %s15 = sphi 0, %s19
      %p16 = scmp.ge.s32.totalorder %s15, 4
      %s25 = sphi 0, %s27
      %s28 = sphi 0, %s25
      %s29 = sphi 0, %s28
      %s45 = sphi 0, %s29
      %s49 = sphi 0, %s49
      %s51 = sphi 0, %s49
      %s52 = sphi 0, %s51
      %s66 = sphi 0, %s52
      %s72 = sphi 0, %s74
      %s75 = sphi 0, %s72
      %s76 = sphi 0, %s75
      %s92 = sphi 0, %s76
    $region4: #{tpu_custom_call.1} parent=1 // loop_header_branch
      %18 = sbr.rel (%p16) target = $region8
    $region5: #{tpu_custom_call.1} parent=1 // loop_body
      %s20 = ssub.s32 %s15, 1
      %s21 = ssub.s32 %s15, 2
      %s22 = sadd.s32 %s15, 1
      %s23 = ssub.s32 %s15, %s22
      %p24 = scmp.eq.s32.totalorder %s23, 0
      %s26 = sadd.s32 %s25, 1
      %s27 = scalar_select %p24, %s25, %s26
      %p30 = pneg %p24
      %p31 = scmp.eq.s32.totalorder %s15, 1
      %p32 = por %p30, %p31
      %p33 = scmp.ne.s32.totalorder %s25, %s28
      %p34 = scmp.eq.s32.totalorder %s15, 0
      %p35 = por %p33, %p34
      %p36 = scmp.ne.s32.totalorder %s25, %s28
      %p37 = scmp.eq.s32.totalorder %s20, 1
      %p38 = por %p36, %p37
      %p39 = scmp.ne.s32.totalorder %s28, %s29
      %p40 = scmp.eq.s32.totalorder %s20, 0
      %p41 = por %p39, %p40
      %p42 = scmp.ne.s32.totalorder %s28, %s29
      %p43 = scmp.eq.s32.totalorder %s21, 1
      %p44 = por %p42, %p43
      %p46 = scmp.ne.s32.totalorder %s29, %s45
      %p47 = scmp.eq.s32.totalorder %s21, 0
      %p48 = por %p46, %p47
      %s50 = sadd.s32 %s49, 1
      %p53 = scmp.eq.s32.totalorder %s15, 1
      %p54 = scmp.ne.s32.totalorder %s49, %s51
      %p55 = scmp.eq.s32.totalorder %s15, 0
      %p56 = por %p54, %p55
      %p57 = scmp.ne.s32.totalorder %s49, %s51
      %p58 = scmp.eq.s32.totalorder %s20, 1
      %p59 = por %p57, %p58
      %p60 = scmp.ne.s32.totalorder %s51, %s52
      %p61 = scmp.eq.s32.totalorder %s20, 0
      %p62 = por %p60, %p61
      %p63 = scmp.ne.s32.totalorder %s51, %s52
      %p64 = scmp.eq.s32.totalorder %s21, 1
      %p65 = por %p63, %p64
      %p67 = scmp.ne.s32.totalorder %s52, %s66
      %p68 = scmp.eq.s32.totalorder %s21, 0
      %p69 = por %p67, %p68
      %s70 = ssub.s32 %s15, %s22
      %p71 = scmp.eq.s32.totalorder %s70, 0
      %s73 = sadd.s32 %s72, 1
      %s74 = scalar_select %p71, %s72, %s73
      %p77 = pneg %p71
      %p78 = scmp.eq.s32.totalorder %s15, 1
      %p79 = por %p77, %p78
      %p80 = scmp.ne.s32.totalorder %s72, %s75
      %p81 = scmp.eq.s32.totalorder %s15, 0
      %p82 = por %p80, %p81
      %p83 = scmp.ne.s32.totalorder %s72, %s75
      %p84 = scmp.eq.s32.totalorder %s20, 1
      %p85 = por %p83, %p84
      %p86 = scmp.ne.s32.totalorder %s75, %s76
      %p87 = scmp.eq.s32.totalorder %s20, 0
      %p88 = por %p86, %p87
      %p89 = scmp.ne.s32.totalorder %s75, %s76
      %p90 = scmp.eq.s32.totalorder %s21, 1
      %p91 = por %p89, %p90
      %p93 = scmp.ne.s32.totalorder %s76, %s92
      %p94 = scmp.eq.s32.totalorder %s21, 0
      %p95 = por %p93, %p94
      %p96 = scmp.le.s32.totalorder 1, %s15
      %p97 = scmp.lt.s32.totalorder %s15, 3
      %p98 = pnand %p96, %p97
      %p99 = pneg %p98
      // Predicated region
      $region9: #{tpu_custom_call.1} parent=5 // pred_check
        _
      $region10: #{tpu_custom_call.1} parent=5 // pred_check_branch
        %101 = sbr.rel (%p98) target = $region12
      $region11: #{tpu_custom_call.1} parent=5 // pred_region
        %s102 = ssub.s32 %s15, 1
        // Predicated region
        $region13: #{tpu_custom_call.1} parent=11 // pred_check
          %p103 = pneg %p62
        $region14: #{tpu_custom_call.1} parent=11 // pred_check_branch
          %105 = sbr.rel (%p103) target = $region16
        $region15: #{tpu_custom_call.1} parent=11 // pred_region
          %s107 = ssub.s32 6144, 6144
          %108 = vsyncadd [#allocation6], %s107
          %s109 = sshll.u32 [#allocation5], 4
          %s110 = int_to_ptr.vmem [resolvable:$true] %s109
          %115 = dma.hbm_to_vmem [thread:$0]  %s1, 6144, %s110, [#allocation6], 384, 384, 24
        $region16: #{tpu_custom_call.1} parent=11 // pred_fallthru
          _
      $region12: #{tpu_custom_call.1} parent=5 // pred_fallthru
        _
      %p116 = scmp.lt.s32.totalorder %s15, 2
      // Predicated region
      $region17: #{tpu_custom_call.1} parent=5 // pred_check
        %p117 = pneg %p116
      $region18: #{tpu_custom_call.1} parent=5 // pred_check_branch
        %119 = sbr.rel (%p117) target = $region20
      $region19: #{tpu_custom_call.1} parent=5 // pred_region
        // Predicated region
        $region21: #{tpu_custom_call.1} parent=19 // pred_check
          %p120 = pneg %p35
        $region22: #{tpu_custom_call.1} parent=19 // pred_check_branch
          %122 = sbr.rel (%p120) target = $region24
        $region23: #{tpu_custom_call.1} parent=19 // pred_region
          %s123 = sand.u32 %s25, 1
          %s124 = scalar_lea.sflag [#allocation3], %s123
          %s125 = sand.u32 %s25, 1
          %s126 = smul.addr %s125, 8
          %s127 = scalar_lea.vmem [#allocation2], %s126
          %s129 = ssub.s32 128, 128
          %130 = vsyncadd %s124, %s129
          %s131 = smul.addr %s15, 128
          %s132 = scalar_lea.hbm %s0, %s131
          %s134 = sshll.u32 %s127, 4
          %s135 = int_to_ptr.vmem [resolvable:$true] %s134
          %137 = dma.hbm_to_vmem [thread:$0]  %s132, 128, %s135, %s124
        $region24: #{tpu_custom_call.1} parent=19 // pred_fallthru
          _
      $region20: #{tpu_custom_call.1} parent=5 // pred_fallthru
        _
      %p138 = scmp.le.s32.totalorder 1, %s15
      %p139 = scmp.lt.s32.totalorder %s15, 3
      %p140 = pnand %p138, %p139
      %p141 = pneg %p140
      // Predicated region
      $region25: #{tpu_custom_call.1} parent=5 // pred_check
        _
      $region26: #{tpu_custom_call.1} parent=5 // pred_check_branch
        %143 = sbr.rel (%p140) target = $region28
      $region27: #{tpu_custom_call.1} parent=5 // pred_region
        %s144 = ssub.s32 %s15, 1
        %s145 = sand.u32 %s28, 1
        %s146 = scalar_lea.sflag [#allocation3], %s145
        %s147 = sand.u32 %s28, 1
        %s148 = smul.addr %s147, 8
        %s149 = scalar_lea.vmem [#allocation2], %s148
        // Predicated region
        $region29: #{tpu_custom_call.1} parent=27 // pred_check
          %p150 = pneg %p41
        $region30: #{tpu_custom_call.1} parent=27 // pred_check_branch
          %152 = sbr.rel (%p150) target = $region32
        $region31: #{tpu_custom_call.1} parent=27 // pred_region
          %153 = dma.done %s146, 128
        $region32: #{tpu_custom_call.1} parent=27 // pred_fallthru
          _
        // Predicated region
        $region33: #{tpu_custom_call.1} parent=27 // pred_check
          %p154 = pneg %p62
        $region34: #{tpu_custom_call.1} parent=27 // pred_check_branch
          %156 = sbr.rel (%p154) target = $region36
        $region35: #{tpu_custom_call.1} parent=27 // pred_region
          %157 = dma.done [#allocation6], 6144
        $region36: #{tpu_custom_call.1} parent=27 // pred_fallthru
          _
        %s158 = sand.u32 %s28, 1
        %s159 = scalar_lea.sflag [#allocation3], %s158
        %s160 = sand.u32 %s28, 1
        %s161 = smul.addr %s160, 8
        %s162 = scalar_lea.vmem [#allocation2], %s161
        %p163 = pneg %p41
        %p164 = pneg %p38
        %p165 = pneg %p62
        %p166 = pneg %p59
        %p167 = pneg %p88
        %p168 = pneg %p85
        %s169 = sand.u32 %s75, 1
        %s170 = scalar_lea.sflag [#allocation4], %s169
        %s171 = sand.u32 %s75, 1
        %s172 = smul.addr %s171, 8
        %s173 = scalar_lea.vmem [#allocation7], %s172
        %v174 = vld [vmem:[%s149] sm:$0xff]
        %v175 = vld [vmem:[#allocation5] sm:$0xff]
        %v176 = vld [vmem:[#allocation5 + $0x8] sm:$0xff]
        %v177 = vld [vmem:[#allocation5 + $0x10] sm:$0xff]
        %v178 = vld [vmem:[#allocation5 + $0x18] sm:$0xff]
        %v179 = vld [vmem:[#allocation5 + $0x20] sm:$0xff]
        %v180 = vld [vmem:[#allocation5 + $0x28] sm:$0xff]
        %v181 = vld [vmem:[#allocation5 + $0x30] sm:$0xff]
        %v182 = vld [vmem:[#allocation5 + $0x38] sm:$0xff]
        %v183 = vld [vmem:[#allocation5 + $0x40] sm:$0xff]
        %v184 = vld [vmem:[#allocation5 + $0x48] sm:$0xff]
        %v185 = vld [vmem:[#allocation5 + $0x50] sm:$0xff]
        %v186 = vld [vmem:[#allocation5 + $0x58] sm:$0xff]
        %v187 = vld [vmem:[#allocation5 + $0x60] sm:$0xff]
        %v188 = vld [vmem:[#allocation5 + $0x68] sm:$0xff]
        %v189 = vld [vmem:[#allocation5 + $0x70] sm:$0xff]
        %v190 = vld [vmem:[#allocation5 + $0x78] sm:$0xff]
        %v191 = vld [vmem:[#allocation5 + $0x80] sm:$0xff]
        %v192 = vld [vmem:[#allocation5 + $0x88] sm:$0xff]
        %v193 = vld [vmem:[#allocation5 + $0x90] sm:$0xff]
        %v194 = vld [vmem:[#allocation5 + $0x98] sm:$0xff]
        %v195 = vld [vmem:[#allocation5 + $0xa0] sm:$0xff]
        %v196 = vld [vmem:[#allocation5 + $0xa8] sm:$0xff]
        %v197 = vld [vmem:[#allocation5 + $0xb0] sm:$0xff]
        %v198 = vld [vmem:[#allocation5 + $0xb8] sm:$0xff]
        %v199 = vld [vmem:[#allocation5 + $0xc0] sm:$0xff]
        %v200 = vld [vmem:[#allocation5 + $0xc8] sm:$0xff]
        %v201 = vld [vmem:[#allocation5 + $0xd0] sm:$0xff]
        %v202 = vld [vmem:[#allocation5 + $0xd8] sm:$0xff]
        %v203 = vld [vmem:[#allocation5 + $0xe0] sm:$0xff]
        %v204 = vld [vmem:[#allocation5 + $0xe8] sm:$0xff]
        %v205 = vld [vmem:[#allocation5 + $0xf0] sm:$0xff]
        %v206 = vld [vmem:[#allocation5 + $0xf8] sm:$0xff]
        %v207 = vld [vmem:[#allocation5 + $0x100] sm:$0xff]
        %v208 = vld [vmem:[#allocation5 + $0x108] sm:$0xff]
        %v209 = vld [vmem:[#allocation5 + $0x110] sm:$0xff]
        %v210 = vld [vmem:[#allocation5 + $0x118] sm:$0xff]
        %v211 = vld [vmem:[#allocation5 + $0x120] sm:$0xff]
        %v212 = vld [vmem:[#allocation5 + $0x128] sm:$0xff]
        %v213 = vld [vmem:[#allocation5 + $0x130] sm:$0xff]
        %v214 = vld [vmem:[#allocation5 + $0x138] sm:$0xff]
        %v215 = vld [vmem:[#allocation5 + $0x140] sm:$0xff]
        %v216 = vld [vmem:[#allocation5 + $0x148] sm:$0xff]
        %v217 = vld [vmem:[#allocation5 + $0x150] sm:$0xff]
        %v218 = vld [vmem:[#allocation5 + $0x158] sm:$0xff]
        %v219 = vld [vmem:[#allocation5 + $0x160] sm:$0xff]
        %v220 = vld [vmem:[#allocation5 + $0x168] sm:$0xff]
        %v221 = vld [vmem:[#allocation5 + $0x170] sm:$0xff]
        %v222 = vld [vmem:[#allocation5 + $0x178] sm:$0xff]
        %223 = vmatprep.subr.mxu0 %v176
        %224 = vmatpush1.msra.mxu0 %v175
        %225 = vmatprep.subr.mxu0 %v179
        %226 = vmatpush1.msra.mxu0 %v178
        %227 = vmatprep.subr.mxu0 %v182
        %228 = vmatpush1.msra.mxu0 %v181
        %229 = vmatprep.subr.mxu0 %v185
        %230 = vmatpush1.msra.mxu0 %v184
        %231 = vmatprep.subr.mxu0 %v188
        %232 = vmatpush1.msra.mxu0 %v187
        %233 = vmatprep.subr.mxu0 %v191
        %234 = vmatpush1.msra.mxu0 %v190
        %235 = vmatprep.subr.mxu0 %v194
        %236 = vmatpush1.msra.mxu0 %v193
        %237 = vmatprep.subr.mxu0 %v197
        %238 = vmatpush1.msra.mxu0 %v196
        %239 = vmatprep.subr.mxu0 %v200
        %240 = vmatpush1.msra.mxu0 %v199
        %241 = vmatprep.subr.mxu0 %v203
        %242 = vmatpush1.msra.mxu0 %v202
        %243 = vmatprep.subr.mxu0 %v206
        %244 = vmatpush1.msra.mxu0 %v205
        %245 = vmatprep.subr.mxu0 %v209
        %246 = vmatpush1.msra.mxu0 %v208
        %247 = vmatprep.subr.mxu0 %v212
        %248 = vmatpush1.msra.mxu0 %v211
        %249 = vmatprep.subr.mxu0 %v215
        %250 = vmatpush1.msra.mxu0 %v214
        %251 = vmatprep.subr.mxu0 %v218
        %252 = vmatpush1.msra.mxu0 %v217
        %253 = vmatprep.subr.mxu0 %v221
        %254 = vmatpush1.msra.mxu0 %v220
        %255 = vmatprep.subr.mxu0 0.0
        %256 = vmatpush1.msra.mxu0 0.0
        %257 = vmatprep.subr.mxu0 0.0
        %258 = vmatpush1.msra.mxu0 0.0
        %259 = vmatprep.subr.mxu0 0.0
        %260 = vmatpush1.msra.mxu0 0.0
        %261 = vmatprep.subr.mxu0 0.0
        %262 = vmatpush1.msra.mxu0 0.0
        %263 = vmatprep.subr.mxu0 0.0
        %264 = vmatpush1.msra.mxu0 0.0
        %265 = vmatprep.subr.mxu0 0.0
        %266 = vmatpush1.msra.mxu0 0.0
        %267 = vmatprep.subr.mxu0 0.0
        %268 = vmatpush1.msra.mxu0 0.0
        %269 = vmatprep.subr.mxu0 0.0
        %270 = vmatpush1.msra.mxu0 0.0
        %271 = vmatprep.subr.mxu0 0.0
        %272 = vmatpush1.msra.mxu0 0.0
        %273 = vmatprep.subr.mxu0 0.0
        %274 = vmatpush1.msra.mxu0 0.0
        %275 = vmatprep.subr.mxu0 0.0
        %276 = vmatpush1.msra.mxu0 0.0
        %277 = vmatprep.subr.mxu0 0.0
        %278 = vmatpush1.msra.mxu0 0.0
        %279 = vmatprep.subr.mxu0 0.0
        %280 = vmatpush1.msra.mxu0 0.0
        %281 = vmatprep.subr.mxu0 0.0
        %282 = vmatpush1.msra.mxu0 0.0
        %283 = vmatprep.subr.mxu0 0.0
        %284 = vmatpush1.msra.mxu0 0.0
        %285 = vmatprep.subr.mxu0 0.0
        %286 = vmatpush1.msra.mxu0 0.0
        %287 = vmatprep.mubr.f32.mxu0 0.0
        %288 = vmatmul.mubr.f32.gmra.mrb[0].mxu0 %v174
        %v289 = vpop.f32.mrb[0].mxu0
        %v290 = vadd.f32 0.0, %v289
        %v291 = vpop.f32.mrb[0].mxu0
        %v292 = vadd.f32 0.0, %v291
        %293 = vdwg.mxu0
        %294 = vmatprep.subr.mxu0 0.0
        %295 = vmatpush1.msra.mxu0 %v177
        %296 = vmatprep.subr.mxu0 0.0
        %297 = vmatpush1.msra.mxu0 %v180
        %298 = vmatprep.subr.mxu0 0.0
        %299 = vmatpush1.msra.mxu0 %v183
        %300 = vmatprep.subr.mxu0 0.0
        %301 = vmatpush1.msra.mxu0 %v186
        %302 = vmatprep.subr.mxu0 0.0
        %303 = vmatpush1.msra.mxu0 %v189
        %304 = vmatprep.subr.mxu0 0.0
        %305 = vmatpush1.msra.mxu0 %v192
        %306 = vmatprep.subr.mxu0 0.0
        %307 = vmatpush1.msra.mxu0 %v195
        %308 = vmatprep.subr.mxu0 0.0
        %309 = vmatpush1.msra.mxu0 %v198
        %310 = vmatprep.subr.mxu0 0.0
        %311 = vmatpush1.msra.mxu0 %v201
        %312 = vmatprep.subr.mxu0 0.0
        %313 = vmatpush1.msra.mxu0 %v204
        %314 = vmatprep.subr.mxu0 0.0
        %315 = vmatpush1.msra.mxu0 %v207
        %316 = vmatprep.subr.mxu0 0.0
        %317 = vmatpush1.msra.mxu0 %v210
        %318 = vmatprep.subr.mxu0 0.0
        %319 = vmatpush1.msra.mxu0 %v213
        %320 = vmatprep.subr.mxu0 0.0
        %321 = vmatpush1.msra.mxu0 %v216
        %322 = vmatprep.subr.mxu0 0.0
        %323 = vmatpush1.msra.mxu0 %v219
        %324 = vmatprep.subr.mxu0 0.0
        %325 = vmatpush1.msra.mxu0 %v222
        %326 = vmatprep.subr.mxu0 0.0
        %327 = vmatpush1.msra.mxu0 0.0
        %328 = vmatprep.subr.mxu0 0.0
        %329 = vmatpush1.msra.mxu0 0.0
        %330 = vmatprep.subr.mxu0 0.0
        %331 = vmatpush1.msra.mxu0 0.0
        %332 = vmatprep.subr.mxu0 0.0
        %333 = vmatpush1.msra.mxu0 0.0
        %334 = vmatprep.subr.mxu0 0.0
        %335 = vmatpush1.msra.mxu0 0.0
        %336 = vmatprep.subr.mxu0 0.0
        %337 = vmatpush1.msra.mxu0 0.0
        %338 = vmatprep.subr.mxu0 0.0
        %339 = vmatpush1.msra.mxu0 0.0
        %340 = vmatprep.subr.mxu0 0.0
        %341 = vmatpush1.msra.mxu0 0.0
        %342 = vmatprep.subr.mxu0 0.0
        %343 = vmatpush1.msra.mxu0 0.0
        %344 = vmatprep.subr.mxu0 0.0
        %345 = vmatpush1.msra.mxu0 0.0
        %346 = vmatprep.subr.mxu0 0.0
        %347 = vmatpush1.msra.mxu0 0.0
        %348 = vmatprep.subr.mxu0 0.0
        %349 = vmatpush1.msra.mxu0 0.0
        %350 = vmatprep.subr.mxu0 0.0
        %351 = vmatpush1.msra.mxu0 0.0
        %352 = vmatprep.subr.mxu0 0.0
        %353 = vmatpush1.msra.mxu0 0.0
        %354 = vmatprep.subr.mxu0 0.0
        %355 = vmatpush1.msra.mxu0 0.0
        %356 = vmatprep.subr.mxu0 0.0
        %357 = vmatpush1.msra.mxu0 0.0
        %358 = vmatprep.mubr.f32.mxu0 0.0
        %359 = vmatmul.mubr.f32.gmra.mrb[0].mxu0 %v174
        %v360 = vpop.f32.mrb[0].mxu0
        %v361 = vadd.f32 0.0, %v360
        %v362 = vpop.f32.mrb[0].mxu0
        %363 = vdwg.mxu0
        %365 = vrot.lane.b32.xlu0 %v290, 112
        %v366 = vpop.permute.xlu0 %365
        %368 = vrot.lane.b32.xlu0 %v290, 96
        %v369 = vpop.permute.xlu0 %368
        %371 = vrot.lane.b32.xlu0 %v290, 80
        %v372 = vpop.permute.xlu0 %371
        %374 = vrot.lane.b32.xlu0 %v290, 64
        %v375 = vpop.permute.xlu0 %374
        %377 = vrot.lane.b32.xlu0 %v290, 48
        %v378 = vpop.permute.xlu0 %377
        %380 = vrot.lane.b32.xlu0 %v290, 32
        %v381 = vpop.permute.xlu0 %380
        %383 = vrot.lane.b32.xlu0 %v290, 16
        %v384 = vpop.permute.xlu0 %383
        %v386 = vcombine.low %v290, %v369
        %v387 = vcombine.high %v290, %v369
        %v389 = vunpack.c.l.s4 1983009808
        %v390 = vunpack.c.0.s8 %v389
        %v391 = vlaneseq
        %v392 = vshrl.u32 %v391, 7
        %v393 = vsub.s32 %v390, %v392
        %v394 = vrot.slane %v386, %v393
        %v396 = vunpack.c.l.s4 1983009808
        %v397 = vunpack.c.0.s8 %v396
        %v398 = vlaneseq
        %v399 = vshrl.u32 %v398, 7
        %v400 = vsub.s32 %v397, %v399
        %v401 = vrot.slane %v387, %v400
        %v402 = vcombine.low %v366, %v372
        %v403 = vcombine.high %v366, %v372
        %v405 = vunpack.c.l.s4 1983009808
        %v406 = vunpack.c.0.s8 %v405
        %v407 = vlaneseq
        %v408 = vshrl.u32 %v407, 7
        %v409 = vsub.s32 %v406, %v408
        %v410 = vrot.slane %v402, %v409
        %v412 = vunpack.c.l.s4 1983009808
        %v413 = vunpack.c.0.s8 %v412
        %v414 = vlaneseq
        %v415 = vshrl.u32 %v414, 7
        %v416 = vsub.s32 %v413, %v415
        %v417 = vrot.slane %v403, %v416
        %v418 = vcombine.low %v375, %v381
        %v419 = vcombine.high %v375, %v381
        %v421 = vunpack.c.l.s4 1983009808
        %v422 = vunpack.c.0.s8 %v421
        %v423 = vlaneseq
        %v424 = vshrl.u32 %v423, 7
        %v425 = vsub.s32 %v422, %v424
        %v426 = vrot.slane %v418, %v425
        %v428 = vunpack.c.l.s4 1983009808
        %v429 = vunpack.c.0.s8 %v428
        %v430 = vlaneseq
        %v431 = vshrl.u32 %v430, 7
        %v432 = vsub.s32 %v429, %v431
        %v433 = vrot.slane %v419, %v432
        %v434 = vcombine.low %v378, %v384
        %v435 = vcombine.high %v378, %v384
        %v437 = vunpack.c.l.s4 1983009808
        %v438 = vunpack.c.0.s8 %v437
        %v439 = vlaneseq
        %v440 = vshrl.u32 %v439, 7
        %v441 = vsub.s32 %v438, %v440
        %v442 = vrot.slane %v434, %v441
        %v444 = vunpack.c.l.s4 1983009808
        %v445 = vunpack.c.0.s8 %v444
        %v446 = vlaneseq
        %v447 = vshrl.u32 %v446, 7
        %v448 = vsub.s32 %v445, %v447
        %v449 = vrot.slane %v435, %v448
        %v450 = vcombine.low %v394, %v410
        %v451 = vcombine.high %v394, %v410
        %v453 = vunpack.c.l.s4 1934713408
        %v454 = vunpack.c.0.s8 %v453
        %v455 = vlaneseq
        %v456 = vshrl.u32 %v455, 7
        %v457 = vsub.s32 %v454, %v456
        %v458 = vrot.slane %v450, %v457
        %v460 = vunpack.c.l.s4 1934713408
        %v461 = vunpack.c.0.s8 %v460
        %v462 = vlaneseq
        %v463 = vshrl.u32 %v462, 7
        %v464 = vsub.s32 %v461, %v463
        %v465 = vrot.slane %v451, %v464
        %v466 = vcombine.low %v401, %v417
        %v467 = vcombine.high %v401, %v417
        %v469 = vunpack.c.l.s4 1934713408
        %v470 = vunpack.c.0.s8 %v469
        %v471 = vlaneseq
        %v472 = vshrl.u32 %v471, 7
        %v473 = vsub.s32 %v470, %v472
        %v474 = vrot.slane %v466, %v473
        %v476 = vunpack.c.l.s4 1934713408
        %v477 = vunpack.c.0.s8 %v476
        %v478 = vlaneseq
        %v479 = vshrl.u32 %v478, 7
        %v480 = vsub.s32 %v477, %v479
        %v481 = vrot.slane %v467, %v480
        %v482 = vcombine.low %v426, %v442
        %v483 = vcombine.high %v426, %v442
        %v485 = vunpack.c.l.s4 1934713408
        %v486 = vunpack.c.0.s8 %v485
        %v487 = vlaneseq
        %v488 = vshrl.u32 %v487, 7
        %v489 = vsub.s32 %v486, %v488
        %v490 = vrot.slane %v482, %v489
        %v492 = vunpack.c.l.s4 1934713408
        %v493 = vunpack.c.0.s8 %v492
        %v494 = vlaneseq
        %v495 = vshrl.u32 %v494, 7
        %v496 = vsub.s32 %v493, %v495
        %v497 = vrot.slane %v483, %v496
        %v498 = vcombine.low %v433, %v449
        %v499 = vcombine.high %v433, %v449
        %v501 = vunpack.c.l.s4 1934713408
        %v502 = vunpack.c.0.s8 %v501
        %v503 = vlaneseq
        %v504 = vshrl.u32 %v503, 7
        %v505 = vsub.s32 %v502, %v504
        %v506 = vrot.slane %v498, %v505
        %v508 = vunpack.c.l.s4 1934713408
        %v509 = vunpack.c.0.s8 %v508
        %v510 = vlaneseq
        %v511 = vshrl.u32 %v510, 7
        %v512 = vsub.s32 %v509, %v511
        %v513 = vrot.slane %v499, %v512
        %v514 = vcombine.low %v458, %v490
        %v515 = vcombine.high %v458, %v490
        %v516 = vcombine.low %v465, %v497
        %v517 = vcombine.high %v465, %v497
        %v518 = vcombine.low %v474, %v506
        %v519 = vcombine.high %v474, %v506
        %v520 = vcombine.low %v481, %v513
        %v521 = vcombine.high %v481, %v513
        %v522 = vcombine.low %v514, %v516
        %v523 = vcombine.high %v514, %v516
        %v525 = vunpack.c.l.s4 1983009808
        %v526 = vunpack.c.0.s8 %v525
        %v527 = vlaneseq
        %v528 = vshrl.u32 %v527, 7
        %v529 = vsub.s32 %v526, %v528
        %v530 = vrot.slane %v522, %v529
        %v532 = vunpack.c.l.s4 1983009808
        %v533 = vunpack.c.0.s8 %v532
        %v534 = vlaneseq
        %v535 = vshrl.u32 %v534, 7
        %v536 = vsub.s32 %v533, %v535
        %v537 = vrot.slane %v523, %v536
        %v538 = vcombine.low %v515, %v517
        %v539 = vcombine.high %v515, %v517
        %v541 = vunpack.c.l.s4 1983009808
        %v542 = vunpack.c.0.s8 %v541
        %v543 = vlaneseq
        %v544 = vshrl.u32 %v543, 7
        %v545 = vsub.s32 %v542, %v544
        %v546 = vrot.slane %v538, %v545
        %v548 = vunpack.c.l.s4 1983009808
        %v549 = vunpack.c.0.s8 %v548
        %v550 = vlaneseq
        %v551 = vshrl.u32 %v550, 7
        %v552 = vsub.s32 %v549, %v551
        %v553 = vrot.slane %v539, %v552
        %v554 = vcombine.low %v518, %v520
        %v555 = vcombine.high %v518, %v520
        %v557 = vunpack.c.l.s4 1983009808
        %v558 = vunpack.c.0.s8 %v557
        %v559 = vlaneseq
        %v560 = vshrl.u32 %v559, 7
        %v561 = vsub.s32 %v558, %v560
        %v562 = vrot.slane %v554, %v561
        %v564 = vunpack.c.l.s4 1983009808
        %v565 = vunpack.c.0.s8 %v564
        %v566 = vlaneseq
        %v567 = vshrl.u32 %v566, 7
        %v568 = vsub.s32 %v565, %v567
        %v569 = vrot.slane %v555, %v568
        %v570 = vcombine.low %v519, %v521
        %v571 = vcombine.high %v519, %v521
        %v573 = vunpack.c.l.s4 1983009808
        %v574 = vunpack.c.0.s8 %v573
        %v575 = vlaneseq
        %v576 = vshrl.u32 %v575, 7
        %v577 = vsub.s32 %v574, %v576
        %v578 = vrot.slane %v570, %v577
        %v580 = vunpack.c.l.s4 1983009808
        %v581 = vunpack.c.0.s8 %v580
        %v582 = vlaneseq
        %v583 = vshrl.u32 %v582, 7
        %v584 = vsub.s32 %v581, %v583
        %v585 = vrot.slane %v571, %v584
        %v586 = vcombine.low %v530, %v546
        %v587 = vcombine.high %v530, %v546
        %v589 = vunpack.c.l.s4 1934713408
        %v590 = vunpack.c.0.s8 %v589
        %v591 = vlaneseq
        %v592 = vshrl.u32 %v591, 7
        %v593 = vsub.s32 %v590, %v592
        %v594 = vrot.slane %v586, %v593
        %v596 = vunpack.c.l.s4 1934713408
        %v597 = vunpack.c.0.s8 %v596
        %v598 = vlaneseq
        %v599 = vshrl.u32 %v598, 7
        %v600 = vsub.s32 %v597, %v599
        %v601 = vrot.slane %v587, %v600
        %v602 = vcombine.low %v537, %v553
        %v603 = vcombine.high %v537, %v553
        %v605 = vunpack.c.l.s4 1934713408
        %v606 = vunpack.c.0.s8 %v605
        %v607 = vlaneseq
        %v608 = vshrl.u32 %v607, 7
        %v609 = vsub.s32 %v606, %v608
        %v610 = vrot.slane %v602, %v609
        %v612 = vunpack.c.l.s4 1934713408
        %v613 = vunpack.c.0.s8 %v612
        %v614 = vlaneseq
        %v615 = vshrl.u32 %v614, 7
        %v616 = vsub.s32 %v613, %v615
        %v617 = vrot.slane %v603, %v616
        %v618 = vcombine.low %v562, %v578
        %v619 = vcombine.high %v562, %v578
        %v621 = vunpack.c.l.s4 1934713408
        %v622 = vunpack.c.0.s8 %v621
        %v623 = vlaneseq
        %v624 = vshrl.u32 %v623, 7
        %v625 = vsub.s32 %v622, %v624
        %v626 = vrot.slane %v618, %v625
        %v628 = vunpack.c.l.s4 1934713408
        %v629 = vunpack.c.0.s8 %v628
        %v630 = vlaneseq
        %v631 = vshrl.u32 %v630, 7
        %v632 = vsub.s32 %v629, %v631
        %v633 = vrot.slane %v619, %v632
        %v634 = vcombine.low %v569, %v585
        %v635 = vcombine.high %v569, %v585
        %v637 = vunpack.c.l.s4 1934713408
        %v638 = vunpack.c.0.s8 %v637
        %v639 = vlaneseq
        %v640 = vshrl.u32 %v639, 7
        %v641 = vsub.s32 %v638, %v640
        %v642 = vrot.slane %v634, %v641
        %v644 = vunpack.c.l.s4 1934713408
        %v645 = vunpack.c.0.s8 %v644
        %v646 = vlaneseq
        %v647 = vshrl.u32 %v646, 7
        %v648 = vsub.s32 %v645, %v647
        %v649 = vrot.slane %v635, %v648
        %v650 = vcombine.low %v594, %v626
        %v651 = vcombine.high %v594, %v626
        %v652 = vcombine.low %v601, %v633
        %v653 = vcombine.high %v601, %v633
        %v654 = vcombine.low %v610, %v642
        %v655 = vcombine.high %v610, %v642
        %v656 = vcombine.low %v617, %v649
        %v657 = vcombine.high %v617, %v649
        %659 = vrot.lane.b32.xlu0 %v292, 112
        %v660 = vpop.permute.xlu0 %659
        %662 = vrot.lane.b32.xlu0 %v292, 96
        %v663 = vpop.permute.xlu0 %662
        %665 = vrot.lane.b32.xlu0 %v292, 80
        %v666 = vpop.permute.xlu0 %665
        %668 = vrot.lane.b32.xlu0 %v292, 64
        %v669 = vpop.permute.xlu0 %668
        %671 = vrot.lane.b32.xlu0 %v292, 48
        %v672 = vpop.permute.xlu0 %671
        %674 = vrot.lane.b32.xlu0 %v292, 32
        %v675 = vpop.permute.xlu0 %674
        %677 = vrot.lane.b32.xlu0 %v292, 16
        %v678 = vpop.permute.xlu0 %677
        %v680 = vcombine.low %v292, %v663
        %v681 = vcombine.high %v292, %v663
        %v683 = vunpack.c.l.s4 1983009808
        %v684 = vunpack.c.0.s8 %v683
        %v685 = vlaneseq
        %v686 = vshrl.u32 %v685, 7
        %v687 = vsub.s32 %v684, %v686
        %v688 = vrot.slane %v680, %v687
        %v690 = vunpack.c.l.s4 1983009808
        %v691 = vunpack.c.0.s8 %v690
        %v692 = vlaneseq
        %v693 = vshrl.u32 %v692, 7
        %v694 = vsub.s32 %v691, %v693
        %v695 = vrot.slane %v681, %v694
        %v696 = vcombine.low %v660, %v666
        %v697 = vcombine.high %v660, %v666
        %v699 = vunpack.c.l.s4 1983009808
        %v700 = vunpack.c.0.s8 %v699
        %v701 = vlaneseq
        %v702 = vshrl.u32 %v701, 7
        %v703 = vsub.s32 %v700, %v702
        %v704 = vrot.slane %v696, %v703
        %v706 = vunpack.c.l.s4 1983009808
        %v707 = vunpack.c.0.s8 %v706
        %v708 = vlaneseq
        %v709 = vshrl.u32 %v708, 7
        %v710 = vsub.s32 %v707, %v709
        %v711 = vrot.slane %v697, %v710
        %v712 = vcombine.low %v669, %v675
        %v713 = vcombine.high %v669, %v675
        %v715 = vunpack.c.l.s4 1983009808
        %v716 = vunpack.c.0.s8 %v715
        %v717 = vlaneseq
        %v718 = vshrl.u32 %v717, 7
        %v719 = vsub.s32 %v716, %v718
        %v720 = vrot.slane %v712, %v719
        %v722 = vunpack.c.l.s4 1983009808
        %v723 = vunpack.c.0.s8 %v722
        %v724 = vlaneseq
        %v725 = vshrl.u32 %v724, 7
        %v726 = vsub.s32 %v723, %v725
        %v727 = vrot.slane %v713, %v726
        %v728 = vcombine.low %v672, %v678
        %v729 = vcombine.high %v672, %v678
        %v731 = vunpack.c.l.s4 1983009808
        %v732 = vunpack.c.0.s8 %v731
        %v733 = vlaneseq
        %v734 = vshrl.u32 %v733, 7
        %v735 = vsub.s32 %v732, %v734
        %v736 = vrot.slane %v728, %v735
        %v738 = vunpack.c.l.s4 1983009808
        %v739 = vunpack.c.0.s8 %v738
        %v740 = vlaneseq
        %v741 = vshrl.u32 %v740, 7
        %v742 = vsub.s32 %v739, %v741
        %v743 = vrot.slane %v729, %v742
        %v744 = vcombine.low %v688, %v704
        %v745 = vcombine.high %v688, %v704
        %v747 = vunpack.c.l.s4 1934713408
        %v748 = vunpack.c.0.s8 %v747
        %v749 = vlaneseq
        %v750 = vshrl.u32 %v749, 7
        %v751 = vsub.s32 %v748, %v750
        %v752 = vrot.slane %v744, %v751
        %v754 = vunpack.c.l.s4 1934713408
        %v755 = vunpack.c.0.s8 %v754
        %v756 = vlaneseq
        %v757 = vshrl.u32 %v756, 7
        %v758 = vsub.s32 %v755, %v757
        %v759 = vrot.slane %v745, %v758
        %v760 = vcombine.low %v695, %v711
        %v761 = vcombine.high %v695, %v711
        %v763 = vunpack.c.l.s4 1934713408
        %v764 = vunpack.c.0.s8 %v763
        %v765 = vlaneseq
        %v766 = vshrl.u32 %v765, 7
        %v767 = vsub.s32 %v764, %v766
        %v768 = vrot.slane %v760, %v767
        %v770 = vunpack.c.l.s4 1934713408
        %v771 = vunpack.c.0.s8 %v770
        %v772 = vlaneseq
        %v773 = vshrl.u32 %v772, 7
        %v774 = vsub.s32 %v771, %v773
        %v775 = vrot.slane %v761, %v774
        %v776 = vcombine.low %v720, %v736
        %v777 = vcombine.high %v720, %v736
        %v779 = vunpack.c.l.s4 1934713408
        %v780 = vunpack.c.0.s8 %v779
        %v781 = vlaneseq
        %v782 = vshrl.u32 %v781, 7
        %v783 = vsub.s32 %v780, %v782
        %v784 = vrot.slane %v776, %v783
        %v786 = vunpack.c.l.s4 1934713408
        %v787 = vunpack.c.0.s8 %v786
        %v788 = vlaneseq
        %v789 = vshrl.u32 %v788, 7
        %v790 = vsub.s32 %v787, %v789
        %v791 = vrot.slane %v777, %v790
        %v792 = vcombine.low %v727, %v743
        %v793 = vcombine.high %v727, %v743
        %v795 = vunpack.c.l.s4 1934713408
        %v796 = vunpack.c.0.s8 %v795
        %v797 = vlaneseq
        %v798 = vshrl.u32 %v797, 7
        %v799 = vsub.s32 %v796, %v798
        %v800 = vrot.slane %v792, %v799
        %v802 = vunpack.c.l.s4 1934713408
        %v803 = vunpack.c.0.s8 %v802
        %v804 = vlaneseq
        %v805 = vshrl.u32 %v804, 7
        %v806 = vsub.s32 %v803, %v805
        %v807 = vrot.slane %v793, %v806
        %v808 = vcombine.low %v752, %v784
        %v809 = vcombine.high %v752, %v784
        %v810 = vcombine.low %v759, %v791
        %v811 = vcombine.high %v759, %v791
        %v812 = vcombine.low %v768, %v800
        %v813 = vcombine.high %v768, %v800
        %v814 = vcombine.low %v775, %v807
        %v815 = vcombine.high %v775, %v807
        %v816 = vcombine.low %v808, %v810
        %v817 = vcombine.high %v808, %v810
        %v819 = vunpack.c.l.s4 1983009808
        %v820 = vunpack.c.0.s8 %v819
        %v821 = vlaneseq
        %v822 = vshrl.u32 %v821, 7
        %v823 = vsub.s32 %v820, %v822
        %v824 = vrot.slane %v816, %v823
        %v826 = vunpack.c.l.s4 1983009808
        %v827 = vunpack.c.0.s8 %v826
        %v828 = vlaneseq
        %v829 = vshrl.u32 %v828, 7
        %v830 = vsub.s32 %v827, %v829
        %v831 = vrot.slane %v817, %v830
        %v832 = vcombine.low %v809, %v811
        %v833 = vcombine.high %v809, %v811
        %v835 = vunpack.c.l.s4 1983009808
        %v836 = vunpack.c.0.s8 %v835
        %v837 = vlaneseq
        %v838 = vshrl.u32 %v837, 7
        %v839 = vsub.s32 %v836, %v838
        %v840 = vrot.slane %v832, %v839
        %v842 = vunpack.c.l.s4 1983009808
        %v843 = vunpack.c.0.s8 %v842
        %v844 = vlaneseq
        %v845 = vshrl.u32 %v844, 7
        %v846 = vsub.s32 %v843, %v845
        %v847 = vrot.slane %v833, %v846
        %v848 = vcombine.low %v812, %v814
        %v849 = vcombine.high %v812, %v814
        %v851 = vunpack.c.l.s4 1983009808
        %v852 = vunpack.c.0.s8 %v851
        %v853 = vlaneseq
        %v854 = vshrl.u32 %v853, 7
        %v855 = vsub.s32 %v852, %v854
        %v856 = vrot.slane %v848, %v855
        %v858 = vunpack.c.l.s4 1983009808
        %v859 = vunpack.c.0.s8 %v858
        %v860 = vlaneseq
        %v861 = vshrl.u32 %v860, 7
        %v862 = vsub.s32 %v859, %v861
        %v863 = vrot.slane %v849, %v862
        %v864 = vcombine.low %v813, %v815
        %v865 = vcombine.high %v813, %v815
        %v867 = vunpack.c.l.s4 1983009808
        %v868 = vunpack.c.0.s8 %v867
        %v869 = vlaneseq
        %v870 = vshrl.u32 %v869, 7
        %v871 = vsub.s32 %v868, %v870
        %v872 = vrot.slane %v864, %v871
        %v874 = vunpack.c.l.s4 1983009808
        %v875 = vunpack.c.0.s8 %v874
        %v876 = vlaneseq
        %v877 = vshrl.u32 %v876, 7
        %v878 = vsub.s32 %v875, %v877
        %v879 = vrot.slane %v865, %v878
        %v880 = vcombine.low %v824, %v840
        %v881 = vcombine.high %v824, %v840
        %v883 = vunpack.c.l.s4 1934713408
        %v884 = vunpack.c.0.s8 %v883
        %v885 = vlaneseq
        %v886 = vshrl.u32 %v885, 7
        %v887 = vsub.s32 %v884, %v886
        %v888 = vrot.slane %v880, %v887
        %v890 = vunpack.c.l.s4 1934713408
        %v891 = vunpack.c.0.s8 %v890
        %v892 = vlaneseq
        %v893 = vshrl.u32 %v892, 7
        %v894 = vsub.s32 %v891, %v893
        %v895 = vrot.slane %v881, %v894
        %v896 = vcombine.low %v831, %v847
        %v897 = vcombine.high %v831, %v847
        %v899 = vunpack.c.l.s4 1934713408
        %v900 = vunpack.c.0.s8 %v899
        %v901 = vlaneseq
        %v902 = vshrl.u32 %v901, 7
        %v903 = vsub.s32 %v900, %v902
        %v904 = vrot.slane %v896, %v903
        %v906 = vunpack.c.l.s4 1934713408
        %v907 = vunpack.c.0.s8 %v906
        %v908 = vlaneseq
        %v909 = vshrl.u32 %v908, 7
        %v910 = vsub.s32 %v907, %v909
        %v911 = vrot.slane %v897, %v910
        %v912 = vcombine.low %v856, %v872
        %v913 = vcombine.high %v856, %v872
        %v915 = vunpack.c.l.s4 1934713408
        %v916 = vunpack.c.0.s8 %v915
        %v917 = vlaneseq
        %v918 = vshrl.u32 %v917, 7
        %v919 = vsub.s32 %v916, %v918
        %v920 = vrot.slane %v912, %v919
        %v922 = vunpack.c.l.s4 1934713408
        %v923 = vunpack.c.0.s8 %v922
        %v924 = vlaneseq
        %v925 = vshrl.u32 %v924, 7
        %v926 = vsub.s32 %v923, %v925
        %v927 = vrot.slane %v913, %v926
        %v928 = vcombine.low %v863, %v879
        %v929 = vcombine.high %v863, %v879
        %v931 = vunpack.c.l.s4 1934713408
        %v932 = vunpack.c.0.s8 %v931
        %v933 = vlaneseq
        %v934 = vshrl.u32 %v933, 7
        %v935 = vsub.s32 %v932, %v934
        %v936 = vrot.slane %v928, %v935
        %v938 = vunpack.c.l.s4 1934713408
        %v939 = vunpack.c.0.s8 %v938
        %v940 = vlaneseq
        %v941 = vshrl.u32 %v940, 7
        %v942 = vsub.s32 %v939, %v941
        %v943 = vrot.slane %v929, %v942
        %v944 = vcombine.low %v888, %v920
        %v945 = vcombine.high %v888, %v920
        %v946 = vcombine.low %v895, %v927
        %v947 = vcombine.high %v895, %v927
        %v948 = vcombine.low %v904, %v936
        %v949 = vcombine.high %v904, %v936
        %v950 = vcombine.low %v911, %v943
        %v951 = vcombine.high %v911, %v943
        %953 = vrot.lane.b32.xlu0 %v361, 112
        %v954 = vpop.permute.xlu0 %953
        %956 = vrot.lane.b32.xlu0 %v361, 96
        %v957 = vpop.permute.xlu0 %956
        %959 = vrot.lane.b32.xlu0 %v361, 80
        %v960 = vpop.permute.xlu0 %959
        %962 = vrot.lane.b32.xlu0 %v361, 64
        %v963 = vpop.permute.xlu0 %962
        %965 = vrot.lane.b32.xlu0 %v361, 48
        %v966 = vpop.permute.xlu0 %965
        %968 = vrot.lane.b32.xlu0 %v361, 32
        %v969 = vpop.permute.xlu0 %968
        %971 = vrot.lane.b32.xlu0 %v361, 16
        %v972 = vpop.permute.xlu0 %971
        %v974 = vcombine.low %v361, %v957
        %v975 = vcombine.high %v361, %v957
        %v977 = vunpack.c.l.s4 1983009808
        %v978 = vunpack.c.0.s8 %v977
        %v979 = vlaneseq
        %v980 = vshrl.u32 %v979, 7
        %v981 = vsub.s32 %v978, %v980
        %v982 = vrot.slane %v974, %v981
        %v984 = vunpack.c.l.s4 1983009808
        %v985 = vunpack.c.0.s8 %v984
        %v986 = vlaneseq
        %v987 = vshrl.u32 %v986, 7
        %v988 = vsub.s32 %v985, %v987
        %v989 = vrot.slane %v975, %v988
        %v990 = vcombine.low %v954, %v960
        %v991 = vcombine.high %v954, %v960
        %v993 = vunpack.c.l.s4 1983009808
        %v994 = vunpack.c.0.s8 %v993
        %v995 = vlaneseq
        %v996 = vshrl.u32 %v995, 7
        %v997 = vsub.s32 %v994, %v996
        %v998 = vrot.slane %v990, %v997
        %v1000 = vunpack.c.l.s4 1983009808
        %v1001 = vunpack.c.0.s8 %v1000
        %v1002 = vlaneseq
        %v1003 = vshrl.u32 %v1002, 7
        %v1004 = vsub.s32 %v1001, %v1003
        %v1005 = vrot.slane %v991, %v1004
        %v1006 = vcombine.low %v963, %v969
        %v1007 = vcombine.high %v963, %v969
        %v1009 = vunpack.c.l.s4 1983009808
        %v1010 = vunpack.c.0.s8 %v1009
        %v1011 = vlaneseq
        %v1012 = vshrl.u32 %v1011, 7
        %v1013 = vsub.s32 %v1010, %v1012
        %v1014 = vrot.slane %v1006, %v1013
        %v1016 = vunpack.c.l.s4 1983009808
        %v1017 = vunpack.c.0.s8 %v1016
        %v1018 = vlaneseq
        %v1019 = vshrl.u32 %v1018, 7
        %v1020 = vsub.s32 %v1017, %v1019
        %v1021 = vrot.slane %v1007, %v1020
        %v1022 = vcombine.low %v966, %v972
        %v1023 = vcombine.high %v966, %v972
        %v1025 = vunpack.c.l.s4 1983009808
        %v1026 = vunpack.c.0.s8 %v1025
        %v1027 = vlaneseq
        %v1028 = vshrl.u32 %v1027, 7
        %v1029 = vsub.s32 %v1026, %v1028
        %v1030 = vrot.slane %v1022, %v1029
        %v1032 = vunpack.c.l.s4 1983009808
        %v1033 = vunpack.c.0.s8 %v1032
        %v1034 = vlaneseq
        %v1035 = vshrl.u32 %v1034, 7
        %v1036 = vsub.s32 %v1033, %v1035
        %v1037 = vrot.slane %v1023, %v1036
        %v1038 = vcombine.low %v982, %v998
        %v1039 = vcombine.high %v982, %v998
        %v1041 = vunpack.c.l.s4 1934713408
        %v1042 = vunpack.c.0.s8 %v1041
        %v1043 = vlaneseq
        %v1044 = vshrl.u32 %v1043, 7
        %v1045 = vsub.s32 %v1042, %v1044
        %v1046 = vrot.slane %v1038, %v1045
        %v1048 = vunpack.c.l.s4 1934713408
        %v1049 = vunpack.c.0.s8 %v1048
        %v1050 = vlaneseq
        %v1051 = vshrl.u32 %v1050, 7
        %v1052 = vsub.s32 %v1049, %v1051
        %v1053 = vrot.slane %v1039, %v1052
        %v1054 = vcombine.low %v989, %v1005
        %v1055 = vcombine.high %v989, %v1005
        %v1057 = vunpack.c.l.s4 1934713408
        %v1058 = vunpack.c.0.s8 %v1057
        %v1059 = vlaneseq
        %v1060 = vshrl.u32 %v1059, 7
        %v1061 = vsub.s32 %v1058, %v1060
        %v1062 = vrot.slane %v1054, %v1061
        %v1064 = vunpack.c.l.s4 1934713408
        %v1065 = vunpack.c.0.s8 %v1064
        %v1066 = vlaneseq
        %v1067 = vshrl.u32 %v1066, 7
        %v1068 = vsub.s32 %v1065, %v1067
        %v1069 = vrot.slane %v1055, %v1068
        %v1070 = vcombine.low %v1014, %v1030
        %v1071 = vcombine.high %v1014, %v1030
        %v1073 = vunpack.c.l.s4 1934713408
        %v1074 = vunpack.c.0.s8 %v1073
        %v1075 = vlaneseq
        %v1076 = vshrl.u32 %v1075, 7
        %v1077 = vsub.s32 %v1074, %v1076
        %v1078 = vrot.slane %v1070, %v1077
        %v1080 = vunpack.c.l.s4 1934713408
        %v1081 = vunpack.c.0.s8 %v1080
        %v1082 = vlaneseq
        %v1083 = vshrl.u32 %v1082, 7
        %v1084 = vsub.s32 %v1081, %v1083
        %v1085 = vrot.slane %v1071, %v1084
        %v1086 = vcombine.low %v1021, %v1037
        %v1087 = vcombine.high %v1021, %v1037
        %v1089 = vunpack.c.l.s4 1934713408
        %v1090 = vunpack.c.0.s8 %v1089
        %v1091 = vlaneseq
        %v1092 = vshrl.u32 %v1091, 7
        %v1093 = vsub.s32 %v1090, %v1092
        %v1094 = vrot.slane %v1086, %v1093
        %v1096 = vunpack.c.l.s4 1934713408
        %v1097 = vunpack.c.0.s8 %v1096
        %v1098 = vlaneseq
        %v1099 = vshrl.u32 %v1098, 7
        %v1100 = vsub.s32 %v1097, %v1099
        %v1101 = vrot.slane %v1087, %v1100
        %v1102 = vcombine.low %v1046, %v1078
        %v1103 = vcombine.high %v1046, %v1078
        %v1104 = vcombine.low %v1053, %v1085
        %v1105 = vcombine.high %v1053, %v1085
        %v1106 = vcombine.low %v1062, %v1094
        %v1107 = vcombine.high %v1062, %v1094
        %v1108 = vcombine.low %v1069, %v1101
        %v1109 = vcombine.high %v1069, %v1101
        %v1110 = vcombine.low %v1102, %v1104
        %v1111 = vcombine.high %v1102, %v1104
        %v1113 = vunpack.c.l.s4 1983009808
        %v1114 = vunpack.c.0.s8 %v1113
        %v1115 = vlaneseq
        %v1116 = vshrl.u32 %v1115, 7
        %v1117 = vsub.s32 %v1114, %v1116
        %v1118 = vrot.slane %v1110, %v1117
        %v1120 = vunpack.c.l.s4 1983009808
        %v1121 = vunpack.c.0.s8 %v1120
        %v1122 = vlaneseq
        %v1123 = vshrl.u32 %v1122, 7
        %v1124 = vsub.s32 %v1121, %v1123
        %v1125 = vrot.slane %v1111, %v1124
        %v1126 = vcombine.low %v1103, %v1105
        %v1127 = vcombine.high %v1103, %v1105
        %v1129 = vunpack.c.l.s4 1983009808
        %v1130 = vunpack.c.0.s8 %v1129
        %v1131 = vlaneseq
        %v1132 = vshrl.u32 %v1131, 7
        %v1133 = vsub.s32 %v1130, %v1132
        %v1134 = vrot.slane %v1126, %v1133
        %v1136 = vunpack.c.l.s4 1983009808
        %v1137 = vunpack.c.0.s8 %v1136
        %v1138 = vlaneseq
        %v1139 = vshrl.u32 %v1138, 7
        %v1140 = vsub.s32 %v1137, %v1139
        %v1141 = vrot.slane %v1127, %v1140
        %v1142 = vcombine.low %v1106, %v1108
        %v1143 = vcombine.high %v1106, %v1108
        %v1145 = vunpack.c.l.s4 1983009808
        %v1146 = vunpack.c.0.s8 %v1145
        %v1147 = vlaneseq
        %v1148 = vshrl.u32 %v1147, 7
        %v1149 = vsub.s32 %v1146, %v1148
        %v1150 = vrot.slane %v1142, %v1149
        %v1152 = vunpack.c.l.s4 1983009808
        %v1153 = vunpack.c.0.s8 %v1152
        %v1154 = vlaneseq
        %v1155 = vshrl.u32 %v1154, 7
        %v1156 = vsub.s32 %v1153, %v1155
        %v1157 = vrot.slane %v1143, %v1156
        %v1158 = vcombine.low %v1107, %v1109
        %v1159 = vcombine.high %v1107, %v1109
        %v1161 = vunpack.c.l.s4 1983009808
        %v1162 = vunpack.c.0.s8 %v1161
        %v1163 = vlaneseq
        %v1164 = vshrl.u32 %v1163, 7
        %v1165 = vsub.s32 %v1162, %v1164
        %v1166 = vrot.slane %v1158, %v1165
        %v1168 = vunpack.c.l.s4 1983009808
        %v1169 = vunpack.c.0.s8 %v1168
        %v1170 = vlaneseq
        %v1171 = vshrl.u32 %v1170, 7
        %v1172 = vsub.s32 %v1169, %v1171
        %v1173 = vrot.slane %v1159, %v1172
        %v1174 = vcombine.low %v1118, %v1134
        %v1175 = vcombine.high %v1118, %v1134
        %v1177 = vunpack.c.l.s4 1934713408
        %v1178 = vunpack.c.0.s8 %v1177
        %v1179 = vlaneseq
        %v1180 = vshrl.u32 %v1179, 7
        %v1181 = vsub.s32 %v1178, %v1180
        %v1182 = vrot.slane %v1174, %v1181
        %v1184 = vunpack.c.l.s4 1934713408
        %v1185 = vunpack.c.0.s8 %v1184
        %v1186 = vlaneseq
        %v1187 = vshrl.u32 %v1186, 7
        %v1188 = vsub.s32 %v1185, %v1187
        %v1189 = vrot.slane %v1175, %v1188
        %v1190 = vcombine.low %v1125, %v1141
        %v1191 = vcombine.high %v1125, %v1141
        %v1193 = vunpack.c.l.s4 1934713408
        %v1194 = vunpack.c.0.s8 %v1193
        %v1195 = vlaneseq
        %v1196 = vshrl.u32 %v1195, 7
        %v1197 = vsub.s32 %v1194, %v1196
        %v1198 = vrot.slane %v1190, %v1197
        %v1200 = vunpack.c.l.s4 1934713408
        %v1201 = vunpack.c.0.s8 %v1200
        %v1202 = vlaneseq
        %v1203 = vshrl.u32 %v1202, 7
        %v1204 = vsub.s32 %v1201, %v1203
        %v1205 = vrot.slane %v1191, %v1204
        %v1206 = vcombine.low %v1150, %v1166
        %v1207 = vcombine.high %v1150, %v1166
        %v1209 = vunpack.c.l.s4 1934713408
        %v1210 = vunpack.c.0.s8 %v1209
        %v1211 = vlaneseq
        %v1212 = vshrl.u32 %v1211, 7
        %v1213 = vsub.s32 %v1210, %v1212
        %v1214 = vrot.slane %v1206, %v1213
        %v1216 = vunpack.c.l.s4 1934713408
        %v1217 = vunpack.c.0.s8 %v1216
        %v1218 = vlaneseq
        %v1219 = vshrl.u32 %v1218, 7
        %v1220 = vsub.s32 %v1217, %v1219
        %v1221 = vrot.slane %v1207, %v1220
        %v1222 = vcombine.low %v1157, %v1173
        %v1223 = vcombine.high %v1157, %v1173
        %v1225 = vunpack.c.l.s4 1934713408
        %v1226 = vunpack.c.0.s8 %v1225
        %v1227 = vlaneseq
        %v1228 = vshrl.u32 %v1227, 7
        %v1229 = vsub.s32 %v1226, %v1228
        %v1230 = vrot.slane %v1222, %v1229
        %v1232 = vunpack.c.l.s4 1934713408
        %v1233 = vunpack.c.0.s8 %v1232
        %v1234 = vlaneseq
        %v1235 = vshrl.u32 %v1234, 7
        %v1236 = vsub.s32 %v1233, %v1235
        %v1237 = vrot.slane %v1223, %v1236
        %v1238 = vcombine.low %v1182, %v1214
        %v1239 = vcombine.high %v1182, %v1214
        %v1240 = vcombine.low %v1189, %v1221
        %v1241 = vcombine.high %v1189, %v1221
        %v1242 = vcombine.low %v1198, %v1230
        %v1243 = vcombine.high %v1198, %v1230
        %v1244 = vcombine.low %v1205, %v1237
        %v1245 = vcombine.high %v1205, %v1237
        %vm1246 = vcmask 130048
        %v1248 = vsel %vm1246, %v650, 0
        %v1251 = vsel %vm1246, %v944, 0
        %1253 = vmatprep.subr.mxu0 0.0
        %1254 = vmatpush1.xpose.msra.mxu0 %v1251
        %1255 = vmatprep.subr.mxu0 0.0
        %1256 = vmatpush1.xpose.msra.mxu0 0.0
        %1257 = vmatprep.subr.mxu0 0.0
        %1258 = vmatpush1.xpose.msra.mxu0 0.0
        %1259 = vmatprep.subr.mxu0 0.0
        %1260 = vmatpush1.xpose.msra.mxu0 0.0
        %1261 = vmatprep.subr.mxu0 0.0
        %1262 = vmatpush1.xpose.msra.mxu0 0.0
        %1263 = vmatprep.subr.mxu0 0.0
        %1264 = vmatpush1.xpose.msra.mxu0 0.0
        %1265 = vmatprep.subr.mxu0 0.0
        %1266 = vmatpush1.xpose.msra.mxu0 0.0
        %1267 = vmatprep.subr.mxu0 0.0
        %1268 = vmatpush1.xpose.msra.mxu0 0.0
        %1269 = vmatprep.subr.mxu0 0.0
        %1270 = vmatpush1.xpose.msra.mxu0 0.0
        %1271 = vmatprep.subr.mxu0 0.0
        %1272 = vmatpush1.xpose.msra.mxu0 0.0
        %1273 = vmatprep.subr.mxu0 0.0
        %1274 = vmatpush1.xpose.msra.mxu0 0.0
        %1275 = vmatprep.subr.mxu0 0.0
        %1276 = vmatpush1.xpose.msra.mxu0 0.0
        %1277 = vmatprep.subr.mxu0 0.0
        %1278 = vmatpush1.xpose.msra.mxu0 0.0
        %1279 = vmatprep.subr.mxu0 0.0
        %1280 = vmatpush1.xpose.msra.mxu0 0.0
        %1281 = vmatprep.subr.mxu0 0.0
        %1282 = vmatpush1.xpose.msra.mxu0 0.0
        %1283 = vmatprep.subr.mxu0 0.0
        %1284 = vmatpush1.xpose.msra.mxu0 0.0
        %1285 = vmatprep.subr.mxu0 0.0
        %1286 = vmatpush1.xpose.msra.mxu0 0.0
        %1287 = vmatprep.subr.mxu0 0.0
        %1288 = vmatpush1.xpose.msra.mxu0 0.0
        %1289 = vmatprep.subr.mxu0 0.0
        %1290 = vmatpush1.xpose.msra.mxu0 0.0
        %1291 = vmatprep.subr.mxu0 0.0
        %1292 = vmatpush1.xpose.msra.mxu0 0.0
        %1293 = vmatprep.subr.mxu0 0.0
        %1294 = vmatpush1.xpose.msra.mxu0 0.0
        %1295 = vmatprep.subr.mxu0 0.0
        %1296 = vmatpush1.xpose.msra.mxu0 0.0
        %1297 = vmatprep.subr.mxu0 0.0
        %1298 = vmatpush1.xpose.msra.mxu0 0.0
        %1299 = vmatprep.subr.mxu0 0.0
        %1300 = vmatpush1.xpose.msra.mxu0 0.0
        %1301 = vmatprep.subr.mxu0 0.0
        %1302 = vmatpush1.xpose.msra.mxu0 0.0
        %1303 = vmatprep.subr.mxu0 0.0
        %1304 = vmatpush1.xpose.msra.mxu0 0.0
        %1305 = vmatprep.subr.mxu0 0.0
        %1306 = vmatpush1.xpose.msra.mxu0 0.0
        %1307 = vmatprep.subr.mxu0 0.0
        %1308 = vmatpush1.xpose.msra.mxu0 0.0
        %1309 = vmatprep.subr.mxu0 0.0
        %1310 = vmatpush1.xpose.msra.mxu0 0.0
        %1311 = vmatprep.subr.mxu0 0.0
        %1312 = vmatpush1.xpose.msra.mxu0 0.0
        %1313 = vmatprep.subr.mxu0 0.0
        %1314 = vmatpush1.xpose.msra.mxu0 0.0
        %1315 = vmatprep.subr.mxu0 0.0
        %1316 = vmatpush1.xpose.msra.mxu0 0.0
        %1317 = vmatprep.mubr.f32.mxu0 0.0
        %1318 = vmatmul.mubr.f32.gmra.mrb[0].mxu0 %v1248
        %v1319 = vpop.f32.mrb[0].mxu0
        %v1320 = vadd.f32 0.0, %v1319
        %v1321 = vpop.f32.mrb[0].mxu0
        %1322 = vdwg.mxu0
        %v1324 = vsel %vm1246, %v651, 0
        %v1327 = vsel %vm1246, %v945, 0
        %1329 = vmatprep.subr.mxu0 0.0
        %1330 = vmatpush1.xpose.msra.mxu0 %v1327
        %1331 = vmatprep.subr.mxu0 0.0
        %1332 = vmatpush1.xpose.msra.mxu0 0.0
        %1333 = vmatprep.subr.mxu0 0.0
        %1334 = vmatpush1.xpose.msra.mxu0 0.0
        %1335 = vmatprep.subr.mxu0 0.0
        %1336 = vmatpush1.xpose.msra.mxu0 0.0
        %1337 = vmatprep.subr.mxu0 0.0
        %1338 = vmatpush1.xpose.msra.mxu0 0.0
        %1339 = vmatprep.subr.mxu0 0.0
        %1340 = vmatpush1.xpose.msra.mxu0 0.0
        %1341 = vmatprep.subr.mxu0 0.0
        %1342 = vmatpush1.xpose.msra.mxu0 0.0
        %1343 = vmatprep.subr.mxu0 0.0
        %1344 = vmatpush1.xpose.msra.mxu0 0.0
        %1345 = vmatprep.subr.mxu0 0.0
        %1346 = vmatpush1.xpose.msra.mxu0 0.0
        %1347 = vmatprep.subr.mxu0 0.0
        %1348 = vmatpush1.xpose.msra.mxu0 0.0
        %1349 = vmatprep.subr.mxu0 0.0
        %1350 = vmatpush1.xpose.msra.mxu0 0.0
        %1351 = vmatprep.subr.mxu0 0.0
        %1352 = vmatpush1.xpose.msra.mxu0 0.0
        %1353 = vmatprep.subr.mxu0 0.0
        %1354 = vmatpush1.xpose.msra.mxu0 0.0
        %1355 = vmatprep.subr.mxu0 0.0
        %1356 = vmatpush1.xpose.msra.mxu0 0.0
        %1357 = vmatprep.subr.mxu0 0.0
        %1358 = vmatpush1.xpose.msra.mxu0 0.0
        %1359 = vmatprep.subr.mxu0 0.0
        %1360 = vmatpush1.xpose.msra.mxu0 0.0
        %1361 = vmatprep.subr.mxu0 0.0
        %1362 = vmatpush1.xpose.msra.mxu0 0.0
        %1363 = vmatprep.subr.mxu0 0.0
        %1364 = vmatpush1.xpose.msra.mxu0 0.0
        %1365 = vmatprep.subr.mxu0 0.0
        %1366 = vmatpush1.xpose.msra.mxu0 0.0
        %1367 = vmatprep.subr.mxu0 0.0
        %1368 = vmatpush1.xpose.msra.mxu0 0.0
        %1369 = vmatprep.subr.mxu0 0.0
        %1370 = vmatpush1.xpose.msra.mxu0 0.0
        %1371 = vmatprep.subr.mxu0 0.0
        %1372 = vmatpush1.xpose.msra.mxu0 0.0
        %1373 = vmatprep.subr.mxu0 0.0
        %1374 = vmatpush1.xpose.msra.mxu0 0.0
        %1375 = vmatprep.subr.mxu0 0.0
        %1376 = vmatpush1.xpose.msra.mxu0 0.0
        %1377 = vmatprep.subr.mxu0 0.0
        %1378 = vmatpush1.xpose.msra.mxu0 0.0
        %1379 = vmatprep.subr.mxu0 0.0
        %1380 = vmatpush1.xpose.msra.mxu0 0.0
        %1381 = vmatprep.subr.mxu0 0.0
        %1382 = vmatpush1.xpose.msra.mxu0 0.0
        %1383 = vmatprep.subr.mxu0 0.0
        %1384 = vmatpush1.xpose.msra.mxu0 0.0
        %1385 = vmatprep.subr.mxu0 0.0
        %1386 = vmatpush1.xpose.msra.mxu0 0.0
        %1387 = vmatprep.subr.mxu0 0.0
        %1388 = vmatpush1.xpose.msra.mxu0 0.0
        %1389 = vmatprep.subr.mxu0 0.0
        %1390 = vmatpush1.xpose.msra.mxu0 0.0
        %1391 = vmatprep.subr.mxu0 0.0
        %1392 = vmatpush1.xpose.msra.mxu0 0.0
        %1393 = vmatprep.mubr.f32.mxu0 0.0
        %1394 = vmatmul.mubr.f32.gmra.mrb[0].mxu0 %v1324
        %v1395 = vpop.f32.mrb[0].mxu0
        %v1396 = vadd.f32 0.0, %v1395
        %v1397 = vpop.f32.mrb[0].mxu0
        %1398 = vdwg.mxu0
        %v1400 = vsel %vm1246, %v652, 0
        %v1403 = vsel %vm1246, %v946, 0
        %1405 = vmatprep.subr.mxu0 0.0
        %1406 = vmatpush1.xpose.msra.mxu0 %v1403
        %1407 = vmatprep.subr.mxu0 0.0
        %1408 = vmatpush1.xpose.msra.mxu0 0.0
        %1409 = vmatprep.subr.mxu0 0.0
        %1410 = vmatpush1.xpose.msra.mxu0 0.0
        %1411 = vmatprep.subr.mxu0 0.0
        %1412 = vmatpush1.xpose.msra.mxu0 0.0
        %1413 = vmatprep.subr.mxu0 0.0
        %1414 = vmatpush1.xpose.msra.mxu0 0.0
        %1415 = vmatprep.subr.mxu0 0.0
        %1416 = vmatpush1.xpose.msra.mxu0 0.0
        %1417 = vmatprep.subr.mxu0 0.0
        %1418 = vmatpush1.xpose.msra.mxu0 0.0
        %1419 = vmatprep.subr.mxu0 0.0
        %1420 = vmatpush1.xpose.msra.mxu0 0.0
        %1421 = vmatprep.subr.mxu0 0.0
        %1422 = vmatpush1.xpose.msra.mxu0 0.0
        %1423 = vmatprep.subr.mxu0 0.0
        %1424 = vmatpush1.xpose.msra.mxu0 0.0
        %1425 = vmatprep.subr.mxu0 0.0
        %1426 = vmatpush1.xpose.msra.mxu0 0.0
        %1427 = vmatprep.subr.mxu0 0.0
        %1428 = vmatpush1.xpose.msra.mxu0 0.0
        %1429 = vmatprep.subr.mxu0 0.0
        %1430 = vmatpush1.xpose.msra.mxu0 0.0
        %1431 = vmatprep.subr.mxu0 0.0
        %1432 = vmatpush1.xpose.msra.mxu0 0.0
        %1433 = vmatprep.subr.mxu0 0.0
        %1434 = vmatpush1.xpose.msra.mxu0 0.0
        %1435 = vmatprep.subr.mxu0 0.0
        %1436 = vmatpush1.xpose.msra.mxu0 0.0
        %1437 = vmatprep.subr.mxu0 0.0
        %1438 = vmatpush1.xpose.msra.mxu0 0.0
        %1439 = vmatprep.subr.mxu0 0.0
        %1440 = vmatpush1.xpose.msra.mxu0 0.0
        %1441 = vmatprep.subr.mxu0 0.0
        %1442 = vmatpush1.xpose.msra.mxu0 0.0
        %1443 = vmatprep.subr.mxu0 0.0
        %1444 = vmatpush1.xpose.msra.mxu0 0.0
        %1445 = vmatprep.subr.mxu0 0.0
        %1446 = vmatpush1.xpose.msra.mxu0 0.0
        %1447 = vmatprep.subr.mxu0 0.0
        %1448 = vmatpush1.xpose.msra.mxu0 0.0
        %1449 = vmatprep.subr.mxu0 0.0
        %1450 = vmatpush1.xpose.msra.mxu0 0.0
        %1451 = vmatprep.subr.mxu0 0.0
        %1452 = vmatpush1.xpose.msra.mxu0 0.0
        %1453 = vmatprep.subr.mxu0 0.0
        %1454 = vmatpush1.xpose.msra.mxu0 0.0
        %1455 = vmatprep.subr.mxu0 0.0
        %1456 = vmatpush1.xpose.msra.mxu0 0.0
        %1457 = vmatprep.subr.mxu0 0.0
        %1458 = vmatpush1.xpose.msra.mxu0 0.0
        %1459 = vmatprep.subr.mxu0 0.0
        %1460 = vmatpush1.xpose.msra.mxu0 0.0
        %1461 = vmatprep.subr.mxu0 0.0
        %1462 = vmatpush1.xpose.msra.mxu0 0.0
        %1463 = vmatprep.subr.mxu0 0.0
        %1464 = vmatpush1.xpose.msra.mxu0 0.0
        %1465 = vmatprep.subr.mxu0 0.0
        %1466 = vmatpush1.xpose.msra.mxu0 0.0
        %1467 = vmatprep.subr.mxu0 0.0
        %1468 = vmatpush1.xpose.msra.mxu0 0.0
        %1469 = vmatprep.mubr.f32.mxu0 0.0
        %1470 = vmatmul.mubr.f32.gmra.mrb[0].mxu0 %v1400
        %v1471 = vpop.f32.mrb[0].mxu0
        %v1472 = vadd.f32 0.0, %v1471
        %v1473 = vpop.f32.mrb[0].mxu0
        %1474 = vdwg.mxu0
        %v1476 = vsel %vm1246, %v653, 0
        %v1479 = vsel %vm1246, %v947, 0
        %1481 = vmatprep.subr.mxu0 0.0
        %1482 = vmatpush1.xpose.msra.mxu0 %v1479
        %1483 = vmatprep.subr.mxu0 0.0
        %1484 = vmatpush1.xpose.msra.mxu0 0.0
        %1485 = vmatprep.subr.mxu0 0.0
        %1486 = vmatpush1.xpose.msra.mxu0 0.0
        %1487 = vmatprep.subr.mxu0 0.0
        %1488 = vmatpush1.xpose.msra.mxu0 0.0
        %1489 = vmatprep.subr.mxu0 0.0
        %1490 = vmatpush1.xpose.msra.mxu0 0.0
        %1491 = vmatprep.subr.mxu0 0.0
        %1492 = vmatpush1.xpose.msra.mxu0 0.0
        %1493 = vmatprep.subr.mxu0 0.0
        %1494 = vmatpush1.xpose.msra.mxu0 0.0
        %1495 = vmatprep.subr.mxu0 0.0
        %1496 = vmatpush1.xpose.msra.mxu0 0.0
        %1497 = vmatprep.subr.mxu0 0.0
        %1498 = vmatpush1.xpose.msra.mxu0 0.0
        %1499 = vmatprep.subr.mxu0 0.0
        %1500 = vmatpush1.xpose.msra.mxu0 0.0
        %1501 = vmatprep.subr.mxu0 0.0
        %1502 = vmatpush1.xpose.msra.mxu0 0.0
        %1503 = vmatprep.subr.mxu0 0.0
        %1504 = vmatpush1.xpose.msra.mxu0 0.0
        %1505 = vmatprep.subr.mxu0 0.0
        %1506 = vmatpush1.xpose.msra.mxu0 0.0
        %1507 = vmatprep.subr.mxu0 0.0
        %1508 = vmatpush1.xpose.msra.mxu0 0.0
        %1509 = vmatprep.subr.mxu0 0.0
        %1510 = vmatpush1.xpose.msra.mxu0 0.0
        %1511 = vmatprep.subr.mxu0 0.0
        %1512 = vmatpush1.xpose.msra.mxu0 0.0
        %1513 = vmatprep.subr.mxu0 0.0
        %1514 = vmatpush1.xpose.msra.mxu0 0.0
        %1515 = vmatprep.subr.mxu0 0.0
        %1516 = vmatpush1.xpose.msra.mxu0 0.0
        %1517 = vmatprep.subr.mxu0 0.0
        %1518 = vmatpush1.xpose.msra.mxu0 0.0
        %1519 = vmatprep.subr.mxu0 0.0
        %1520 = vmatpush1.xpose.msra.mxu0 0.0
        %1521 = vmatprep.subr.mxu0 0.0
        %1522 = vmatpush1.xpose.msra.mxu0 0.0
        %1523 = vmatprep.subr.mxu0 0.0
        %1524 = vmatpush1.xpose.msra.mxu0 0.0
        %1525 = vmatprep.subr.mxu0 0.0
        %1526 = vmatpush1.xpose.msra.mxu0 0.0
        %1527 = vmatprep.subr.mxu0 0.0
        %1528 = vmatpush1.xpose.msra.mxu0 0.0
        %1529 = vmatprep.subr.mxu0 0.0
        %1530 = vmatpush1.xpose.msra.mxu0 0.0
        %1531 = vmatprep.subr.mxu0 0.0
        %1532 = vmatpush1.xpose.msra.mxu0 0.0
        %1533 = vmatprep.subr.mxu0 0.0
        %1534 = vmatpush1.xpose.msra.mxu0 0.0
        %1535 = vmatprep.subr.mxu0 0.0
        %1536 = vmatpush1.xpose.msra.mxu0 0.0
        %1537 = vmatprep.subr.mxu0 0.0
        %1538 = vmatpush1.xpose.msra.mxu0 0.0
        %1539 = vmatprep.subr.mxu0 0.0
        %1540 = vmatpush1.xpose.msra.mxu0 0.0
        %1541 = vmatprep.subr.mxu0 0.0
        %1542 = vmatpush1.xpose.msra.mxu0 0.0
        %1543 = vmatprep.subr.mxu0 0.0
        %1544 = vmatpush1.xpose.msra.mxu0 0.0
        %1545 = vmatprep.mubr.f32.mxu0 0.0
        %1546 = vmatmul.mubr.f32.gmra.mrb[0].mxu0 %v1476
        %v1547 = vpop.f32.mrb[0].mxu0
        %v1548 = vadd.f32 0.0, %v1547
        %v1549 = vpop.f32.mrb[0].mxu0
        %1550 = vdwg.mxu0
        %v1552 = vsel %vm1246, %v654, 0
        %v1555 = vsel %vm1246, %v948, 0
        %1557 = vmatprep.subr.mxu0 0.0
        %1558 = vmatpush1.xpose.msra.mxu0 %v1555
        %1559 = vmatprep.subr.mxu0 0.0
        %1560 = vmatpush1.xpose.msra.mxu0 0.0
        %1561 = vmatprep.subr.mxu0 0.0
        %1562 = vmatpush1.xpose.msra.mxu0 0.0
        %1563 = vmatprep.subr.mxu0 0.0
        %1564 = vmatpush1.xpose.msra.mxu0 0.0
        %1565 = vmatprep.subr.mxu0 0.0
        %1566 = vmatpush1.xpose.msra.mxu0 0.0
        %1567 = vmatprep.subr.mxu0 0.0
        %1568 = vmatpush1.xpose.msra.mxu0 0.0
        %1569 = vmatprep.subr.mxu0 0.0
        %1570 = vmatpush1.xpose.msra.mxu0 0.0
        %1571 = vmatprep.subr.mxu0 0.0
        %1572 = vmatpush1.xpose.msra.mxu0 0.0
        %1573 = vmatprep.subr.mxu0 0.0
        %1574 = vmatpush1.xpose.msra.mxu0 0.0
        %1575 = vmatprep.subr.mxu0 0.0
        %1576 = vmatpush1.xpose.msra.mxu0 0.0
        %1577 = vmatprep.subr.mxu0 0.0
        %1578 = vmatpush1.xpose.msra.mxu0 0.0
        %1579 = vmatprep.subr.mxu0 0.0
        %1580 = vmatpush1.xpose.msra.mxu0 0.0
        %1581 = vmatprep.subr.mxu0 0.0
        %1582 = vmatpush1.xpose.msra.mxu0 0.0
        %1583 = vmatprep.subr.mxu0 0.0
        %1584 = vmatpush1.xpose.msra.mxu0 0.0
        %1585 = vmatprep.subr.mxu0 0.0
        %1586 = vmatpush1.xpose.msra.mxu0 0.0
        %1587 = vmatprep.subr.mxu0 0.0
        %1588 = vmatpush1.xpose.msra.mxu0 0.0
        %1589 = vmatprep.subr.mxu0 0.0
        %1590 = vmatpush1.xpose.msra.mxu0 0.0
        %1591 = vmatprep.subr.mxu0 0.0
        %1592 = vmatpush1.xpose.msra.mxu0 0.0
        %1593 = vmatprep.subr.mxu0 0.0
        %1594 = vmatpush1.xpose.msra.mxu0 0.0
        %1595 = vmatprep.subr.mxu0 0.0
        %1596 = vmatpush1.xpose.msra.mxu0 0.0
        %1597 = vmatprep.subr.mxu0 0.0
        %1598 = vmatpush1.xpose.msra.mxu0 0.0
        %1599 = vmatprep.subr.mxu0 0.0
        %1600 = vmatpush1.xpose.msra.mxu0 0.0
        %1601 = vmatprep.subr.mxu0 0.0
        %1602 = vmatpush1.xpose.msra.mxu0 0.0
        %1603 = vmatprep.subr.mxu0 0.0
        %1604 = vmatpush1.xpose.msra.mxu0 0.0
        %1605 = vmatprep.subr.mxu0 0.0
        %1606 = vmatpush1.xpose.msra.mxu0 0.0
        %1607 = vmatprep.subr.mxu0 0.0
        %1608 = vmatpush1.xpose.msra.mxu0 0.0
        %1609 = vmatprep.subr.mxu0 0.0
        %1610 = vmatpush1.xpose.msra.mxu0 0.0
        %1611 = vmatprep.subr.mxu0 0.0
        %1612 = vmatpush1.xpose.msra.mxu0 0.0
        %1613 = vmatprep.subr.mxu0 0.0
        %1614 = vmatpush1.xpose.msra.mxu0 0.0
        %1615 = vmatprep.subr.mxu0 0.0
        %1616 = vmatpush1.xpose.msra.mxu0 0.0
        %1617 = vmatprep.subr.mxu0 0.0
        %1618 = vmatpush1.xpose.msra.mxu0 0.0
        %1619 = vmatprep.subr.mxu0 0.0
        %1620 = vmatpush1.xpose.msra.mxu0 0.0
        %1621 = vmatprep.mubr.f32.mxu0 0.0
        %1622 = vmatmul.mubr.f32.gmra.mrb[0].mxu0 %v1552
        %v1623 = vpop.f32.mrb[0].mxu0
        %v1624 = vadd.f32 0.0, %v1623
        %v1625 = vpop.f32.mrb[0].mxu0
        %1626 = vdwg.mxu0
        %v1628 = vsel %vm1246, %v655, 0
        %v1631 = vsel %vm1246, %v949, 0
        %1633 = vmatprep.subr.mxu0 0.0
        %1634 = vmatpush1.xpose.msra.mxu0 %v1631
        %1635 = vmatprep.subr.mxu0 0.0
        %1636 = vmatpush1.xpose.msra.mxu0 0.0
        %1637 = vmatprep.subr.mxu0 0.0
        %1638 = vmatpush1.xpose.msra.mxu0 0.0
        %1639 = vmatprep.subr.mxu0 0.0
        %1640 = vmatpush1.xpose.msra.mxu0 0.0
        %1641 = vmatprep.subr.mxu0 0.0
        %1642 = vmatpush1.xpose.msra.mxu0 0.0
        %1643 = vmatprep.subr.mxu0 0.0
        %1644 = vmatpush1.xpose.msra.mxu0 0.0
        %1645 = vmatprep.subr.mxu0 0.0
        %1646 = vmatpush1.xpose.msra.mxu0 0.0
        %1647 = vmatprep.subr.mxu0 0.0
        %1648 = vmatpush1.xpose.msra.mxu0 0.0
        %1649 = vmatprep.subr.mxu0 0.0
        %1650 = vmatpush1.xpose.msra.mxu0 0.0
        %1651 = vmatprep.subr.mxu0 0.0
        %1652 = vmatpush1.xpose.msra.mxu0 0.0
        %1653 = vmatprep.subr.mxu0 0.0
        %1654 = vmatpush1.xpose.msra.mxu0 0.0
        %1655 = vmatprep.subr.mxu0 0.0
        %1656 = vmatpush1.xpose.msra.mxu0 0.0
        %1657 = vmatprep.subr.mxu0 0.0
        %1658 = vmatpush1.xpose.msra.mxu0 0.0
        %1659 = vmatprep.subr.mxu0 0.0
        %1660 = vmatpush1.xpose.msra.mxu0 0.0
        %1661 = vmatprep.subr.mxu0 0.0
        %1662 = vmatpush1.xpose.msra.mxu0 0.0
        %1663 = vmatprep.subr.mxu0 0.0
        %1664 = vmatpush1.xpose.msra.mxu0 0.0
        %1665 = vmatprep.subr.mxu0 0.0
        %1666 = vmatpush1.xpose.msra.mxu0 0.0
        %1667 = vmatprep.subr.mxu0 0.0
        %1668 = vmatpush1.xpose.msra.mxu0 0.0
        %1669 = vmatprep.subr.mxu0 0.0
        %1670 = vmatpush1.xpose.msra.mxu0 0.0
        %1671 = vmatprep.subr.mxu0 0.0
        %1672 = vmatpush1.xpose.msra.mxu0 0.0
        %1673 = vmatprep.subr.mxu0 0.0
        %1674 = vmatpush1.xpose.msra.mxu0 0.0
        %1675 = vmatprep.subr.mxu0 0.0
        %1676 = vmatpush1.xpose.msra.mxu0 0.0
        %1677 = vmatprep.subr.mxu0 0.0
        %1678 = vmatpush1.xpose.msra.mxu0 0.0
        %1679 = vmatprep.subr.mxu0 0.0
        %1680 = vmatpush1.xpose.msra.mxu0 0.0
        %1681 = vmatprep.subr.mxu0 0.0
        %1682 = vmatpush1.xpose.msra.mxu0 0.0
        %1683 = vmatprep.subr.mxu0 0.0
        %1684 = vmatpush1.xpose.msra.mxu0 0.0
        %1685 = vmatprep.subr.mxu0 0.0
        %1686 = vmatpush1.xpose.msra.mxu0 0.0
        %1687 = vmatprep.subr.mxu0 0.0
        %1688 = vmatpush1.xpose.msra.mxu0 0.0
        %1689 = vmatprep.subr.mxu0 0.0
        %1690 = vmatpush1.xpose.msra.mxu0 0.0
        %1691 = vmatprep.subr.mxu0 0.0
        %1692 = vmatpush1.xpose.msra.mxu0 0.0
        %1693 = vmatprep.subr.mxu0 0.0
        %1694 = vmatpush1.xpose.msra.mxu0 0.0
        %1695 = vmatprep.subr.mxu0 0.0
        %1696 = vmatpush1.xpose.msra.mxu0 0.0
        %1697 = vmatprep.mubr.f32.mxu0 0.0
        %1698 = vmatmul.mubr.f32.gmra.mrb[0].mxu0 %v1628
        %v1699 = vpop.f32.mrb[0].mxu0
        %v1700 = vadd.f32 0.0, %v1699
        %v1701 = vpop.f32.mrb[0].mxu0
        %1702 = vdwg.mxu0
        %v1704 = vsel %vm1246, %v656, 0
        %v1707 = vsel %vm1246, %v950, 0
        %1709 = vmatprep.subr.mxu0 0.0
        %1710 = vmatpush1.xpose.msra.mxu0 %v1707
        %1711 = vmatprep.subr.mxu0 0.0
        %1712 = vmatpush1.xpose.msra.mxu0 0.0
        %1713 = vmatprep.subr.mxu0 0.0
        %1714 = vmatpush1.xpose.msra.mxu0 0.0
        %1715 = vmatprep.subr.mxu0 0.0
        %1716 = vmatpush1.xpose.msra.mxu0 0.0
        %1717 = vmatprep.subr.mxu0 0.0
        %1718 = vmatpush1.xpose.msra.mxu0 0.0
        %1719 = vmatprep.subr.mxu0 0.0
        %1720 = vmatpush1.xpose.msra.mxu0 0.0
        %1721 = vmatprep.subr.mxu0 0.0
        %1722 = vmatpush1.xpose.msra.mxu0 0.0
        %1723 = vmatprep.subr.mxu0 0.0
        %1724 = vmatpush1.xpose.msra.mxu0 0.0
        %1725 = vmatprep.subr.mxu0 0.0
        %1726 = vmatpush1.xpose.msra.mxu0 0.0
        %1727 = vmatprep.subr.mxu0 0.0
        %1728 = vmatpush1.xpose.msra.mxu0 0.0
        %1729 = vmatprep.subr.mxu0 0.0
        %1730 = vmatpush1.xpose.msra.mxu0 0.0
        %1731 = vmatprep.subr.mxu0 0.0
        %1732 = vmatpush1.xpose.msra.mxu0 0.0
        %1733 = vmatprep.subr.mxu0 0.0
        %1734 = vmatpush1.xpose.msra.mxu0 0.0
        %1735 = vmatprep.subr.mxu0 0.0
        %1736 = vmatpush1.xpose.msra.mxu0 0.0
        %1737 = vmatprep.subr.mxu0 0.0
        %1738 = vmatpush1.xpose.msra.mxu0 0.0
        %1739 = vmatprep.subr.mxu0 0.0
        %1740 = vmatpush1.xpose.msra.mxu0 0.0
        %1741 = vmatprep.subr.mxu0 0.0
        %1742 = vmatpush1.xpose.msra.mxu0 0.0
        %1743 = vmatprep.subr.mxu0 0.0
        %1744 = vmatpush1.xpose.msra.mxu0 0.0
        %1745 = vmatprep.subr.mxu0 0.0
        %1746 = vmatpush1.xpose.msra.mxu0 0.0
        %1747 = vmatprep.subr.mxu0 0.0
        %1748 = vmatpush1.xpose.msra.mxu0 0.0
        %1749 = vmatprep.subr.mxu0 0.0
        %1750 = vmatpush1.xpose.msra.mxu0 0.0
        %1751 = vmatprep.subr.mxu0 0.0
        %1752 = vmatpush1.xpose.msra.mxu0 0.0
        %1753 = vmatprep.subr.mxu0 0.0
        %1754 = vmatpush1.xpose.msra.mxu0 0.0
        %1755 = vmatprep.subr.mxu0 0.0
        %1756 = vmatpush1.xpose.msra.mxu0 0.0
        %1757 = vmatprep.subr.mxu0 0.0
        %1758 = vmatpush1.xpose.msra.mxu0 0.0
        %1759 = vmatprep.subr.mxu0 0.0
        %1760 = vmatpush1.xpose.msra.mxu0 0.0
        %1761 = vmatprep.subr.mxu0 0.0
        %1762 = vmatpush1.xpose.msra.mxu0 0.0
        %1763 = vmatprep.subr.mxu0 0.0
        %1764 = vmatpush1.xpose.msra.mxu0 0.0
        %1765 = vmatprep.subr.mxu0 0.0
        %1766 = vmatpush1.xpose.msra.mxu0 0.0
        %1767 = vmatprep.subr.mxu0 0.0
        %1768 = vmatpush1.xpose.msra.mxu0 0.0
        %1769 = vmatprep.subr.mxu0 0.0
        %1770 = vmatpush1.xpose.msra.mxu0 0.0
        %1771 = vmatprep.subr.mxu0 0.0
        %1772 = vmatpush1.xpose.msra.mxu0 0.0
        %1773 = vmatprep.mubr.f32.mxu0 0.0
        %1774 = vmatmul.mubr.f32.gmra.mrb[0].mxu0 %v1704
        %v1775 = vpop.f32.mrb[0].mxu0
        %v1776 = vadd.f32 0.0, %v1775
        %v1777 = vpop.f32.mrb[0].mxu0
        %1778 = vdwg.mxu0
        %v1780 = vsel %vm1246, %v657, 0
        %v1783 = vsel %vm1246, %v951, 0
        %1785 = vmatprep.subr.mxu0 0.0
        %1786 = vmatpush1.xpose.msra.mxu0 %v1783
        %1787 = vmatprep.subr.mxu0 0.0
        %1788 = vmatpush1.xpose.msra.mxu0 0.0
        %1789 = vmatprep.subr.mxu0 0.0
        %1790 = vmatpush1.xpose.msra.mxu0 0.0
        %1791 = vmatprep.subr.mxu0 0.0
        %1792 = vmatpush1.xpose.msra.mxu0 0.0
        %1793 = vmatprep.subr.mxu0 0.0
        %1794 = vmatpush1.xpose.msra.mxu0 0.0
        %1795 = vmatprep.subr.mxu0 0.0
        %1796 = vmatpush1.xpose.msra.mxu0 0.0
        %1797 = vmatprep.subr.mxu0 0.0
        %1798 = vmatpush1.xpose.msra.mxu0 0.0
        %1799 = vmatprep.subr.mxu0 0.0
        %1800 = vmatpush1.xpose.msra.mxu0 0.0
        %1801 = vmatprep.subr.mxu0 0.0
        %1802 = vmatpush1.xpose.msra.mxu0 0.0
        %1803 = vmatprep.subr.mxu0 0.0
        %1804 = vmatpush1.xpose.msra.mxu0 0.0
        %1805 = vmatprep.subr.mxu0 0.0
        %1806 = vmatpush1.xpose.msra.mxu0 0.0
        %1807 = vmatprep.subr.mxu0 0.0
        %1808 = vmatpush1.xpose.msra.mxu0 0.0
        %1809 = vmatprep.subr.mxu0 0.0
        %1810 = vmatpush1.xpose.msra.mxu0 0.0
        %1811 = vmatprep.subr.mxu0 0.0
        %1812 = vmatpush1.xpose.msra.mxu0 0.0
        %1813 = vmatprep.subr.mxu0 0.0
        %1814 = vmatpush1.xpose.msra.mxu0 0.0
        %1815 = vmatprep.subr.mxu0 0.0
        %1816 = vmatpush1.xpose.msra.mxu0 0.0
        %1817 = vmatprep.subr.mxu0 0.0
        %1818 = vmatpush1.xpose.msra.mxu0 0.0
        %1819 = vmatprep.subr.mxu0 0.0
        %1820 = vmatpush1.xpose.msra.mxu0 0.0
        %1821 = vmatprep.subr.mxu0 0.0
        %1822 = vmatpush1.xpose.msra.mxu0 0.0
        %1823 = vmatprep.subr.mxu0 0.0
        %1824 = vmatpush1.xpose.msra.mxu0 0.0
        %1825 = vmatprep.subr.mxu0 0.0
        %1826 = vmatpush1.xpose.msra.mxu0 0.0
        %1827 = vmatprep.subr.mxu0 0.0
        %1828 = vmatpush1.xpose.msra.mxu0 0.0
        %1829 = vmatprep.subr.mxu0 0.0
        %1830 = vmatpush1.xpose.msra.mxu0 0.0
        %1831 = vmatprep.subr.mxu0 0.0
        %1832 = vmatpush1.xpose.msra.mxu0 0.0
        %1833 = vmatprep.subr.mxu0 0.0
        %1834 = vmatpush1.xpose.msra.mxu0 0.0
        %1835 = vmatprep.subr.mxu0 0.0
        %1836 = vmatpush1.xpose.msra.mxu0 0.0
        %1837 = vmatprep.subr.mxu0 0.0
        %1838 = vmatpush1.xpose.msra.mxu0 0.0
        %1839 = vmatprep.subr.mxu0 0.0
        %1840 = vmatpush1.xpose.msra.mxu0 0.0
        %1841 = vmatprep.subr.mxu0 0.0
        %1842 = vmatpush1.xpose.msra.mxu0 0.0
        %1843 = vmatprep.subr.mxu0 0.0
        %1844 = vmatpush1.xpose.msra.mxu0 0.0
        %1845 = vmatprep.subr.mxu0 0.0
        %1846 = vmatpush1.xpose.msra.mxu0 0.0
        %1847 = vmatprep.subr.mxu0 0.0
        %1848 = vmatpush1.xpose.msra.mxu0 0.0
        %1849 = vmatprep.mubr.f32.mxu0 0.0
        %1850 = vmatmul.mubr.f32.gmra.mrb[0].mxu0 %v1780
        %v1851 = vpop.f32.mrb[0].mxu0
        %v1852 = vadd.f32 0.0, %v1851
        %v1853 = vpop.f32.mrb[0].mxu0
        %1854 = vdwg.mxu0
        %vm1855 = vcmask 64512
        %v1856 = vsel %vm1855, %v1320, -inf
        %1857 = vmax.xlane.f32.xlu0 %v1856
        %v1858 = vpop.xlane.xlu0 %1857
        %v1859 = vsel %vm1855, %v1396, -inf
        %1860 = vmax.xlane.f32.xlu0 %v1859
        %v1861 = vpop.xlane.xlu0 %1860
        %v1862 = vsel %vm1855, %v1472, -inf
        %1863 = vmax.xlane.f32.xlu0 %v1862
        %v1864 = vpop.xlane.xlu0 %1863
        %v1865 = vsel %vm1855, %v1548, -inf
        %1866 = vmax.xlane.f32.xlu0 %v1865
        %v1867 = vpop.xlane.xlu0 %1866
        %v1868 = vsel %vm1855, %v1624, -inf
        %1869 = vmax.xlane.f32.xlu0 %v1868
        %v1870 = vpop.xlane.xlu0 %1869
        %v1871 = vsel %vm1855, %v1700, -inf
        %1872 = vmax.xlane.f32.xlu0 %v1871
        %v1873 = vpop.xlane.xlu0 %1872
        %v1874 = vsel %vm1855, %v1776, -inf
        %1875 = vmax.xlane.f32.xlu0 %v1874
        %v1876 = vpop.xlane.xlu0 %1875
        %v1877 = vsel %vm1855, %v1852, -inf
        %1878 = vmax.xlane.f32.xlu0 %v1877
        %v1879 = vpop.xlane.xlu0 %1878
        %v1880 = vsub.f32 %v1320, %v1858
        %v1881 = vsub.f32 %v1396, %v1861
        %v1882 = vsub.f32 %v1472, %v1864
        %v1883 = vsub.f32 %v1548, %v1867
        %v1884 = vsub.f32 %v1624, %v1870
        %v1885 = vsub.f32 %v1700, %v1873
        %v1886 = vsub.f32 %v1776, %v1876
        %v1887 = vsub.f32 %v1852, %v1879
        %v1888 = vmul.f32 %v1880, 1.442695
        %v1889 = vpow.pop %v1888
        %v1890 = vmul.f32 %v1881, 1.442695
        %v1891 = vpow.pop %v1890
        %v1892 = vmul.f32 %v1882, 1.442695
        %v1893 = vpow.pop %v1892
        %v1894 = vmul.f32 %v1883, 1.442695
        %v1895 = vpow.pop %v1894
        %v1896 = vmul.f32 %v1884, 1.442695
        %v1897 = vpow.pop %v1896
        %v1898 = vmul.f32 %v1885, 1.442695
        %v1899 = vpow.pop %v1898
        %v1900 = vmul.f32 %v1886, 1.442695
        %v1901 = vpow.pop %v1900
        %v1902 = vmul.f32 %v1887, 1.442695
        %v1903 = vpow.pop %v1902
        %v1904 = vsel %vm1855, %v1889, 0.0
        %1905 = vadd.xlane.f32.xlu0 %v1904
        %v1906 = vpop.xlane.xlu0 %1905
        %v1907 = vsel %vm1855, %v1891, 0.0
        %1908 = vadd.xlane.f32.xlu0 %v1907
        %v1909 = vpop.xlane.xlu0 %1908
        %v1910 = vsel %vm1855, %v1893, 0.0
        %1911 = vadd.xlane.f32.xlu0 %v1910
        %v1912 = vpop.xlane.xlu0 %1911
        %v1913 = vsel %vm1855, %v1895, 0.0
        %1914 = vadd.xlane.f32.xlu0 %v1913
        %v1915 = vpop.xlane.xlu0 %1914
        %v1916 = vsel %vm1855, %v1897, 0.0
        %1917 = vadd.xlane.f32.xlu0 %v1916
        %v1918 = vpop.xlane.xlu0 %1917
        %v1919 = vsel %vm1855, %v1899, 0.0
        %1920 = vadd.xlane.f32.xlu0 %v1919
        %v1921 = vpop.xlane.xlu0 %1920
        %v1922 = vsel %vm1855, %v1901, 0.0
        %1923 = vadd.xlane.f32.xlu0 %v1922
        %v1924 = vpop.xlane.xlu0 %1923
        %v1925 = vsel %vm1855, %v1903, 0.0
        %1926 = vadd.xlane.f32.xlu0 %v1925
        %v1927 = vpop.xlane.xlu0 %1926
        %v1928 = vrcp.pop %v1906
        %v1929 = vmul.f32 %v1889, %v1928
        %v1930 = vrcp.pop %v1909
        %v1931 = vmul.f32 %v1891, %v1930
        %v1932 = vrcp.pop %v1912
        %v1933 = vmul.f32 %v1893, %v1932
        %v1934 = vrcp.pop %v1915
        %v1935 = vmul.f32 %v1895, %v1934
        %v1936 = vrcp.pop %v1918
        %v1937 = vmul.f32 %v1897, %v1936
        %v1938 = vrcp.pop %v1921
        %v1939 = vmul.f32 %v1899, %v1938
        %v1940 = vrcp.pop %v1924
        %v1941 = vmul.f32 %v1901, %v1940
        %v1942 = vrcp.pop %v1927
        %v1943 = vmul.f32 %v1903, %v1942
        %v1945 = vsel %vm1855, %v1929, 0
        %1947 = vmatprep.subr.mxu0 0.0
        %1948 = vmatpush1.msra.mxu0 %v1238
        %1949 = vmatprep.subr.mxu0 0.0
        %1950 = vmatpush1.msra.mxu0 0.0
        %1951 = vmatprep.subr.mxu0 0.0
        %1952 = vmatpush1.msra.mxu0 0.0
        %1953 = vmatprep.subr.mxu0 0.0
        %1954 = vmatpush1.msra.mxu0 0.0
        %1955 = vmatprep.subr.mxu0 0.0
        %1956 = vmatpush1.msra.mxu0 0.0
        %1957 = vmatprep.subr.mxu0 0.0
        %1958 = vmatpush1.msra.mxu0 0.0
        %1959 = vmatprep.subr.mxu0 0.0
        %1960 = vmatpush1.msra.mxu0 0.0
        %1961 = vmatprep.subr.mxu0 0.0
        %1962 = vmatpush1.msra.mxu0 0.0
        %1963 = vmatprep.subr.mxu0 0.0
        %1964 = vmatpush1.msra.mxu0 0.0
        %1965 = vmatprep.subr.mxu0 0.0
        %1966 = vmatpush1.msra.mxu0 0.0
        %1967 = vmatprep.subr.mxu0 0.0
        %1968 = vmatpush1.msra.mxu0 0.0
        %1969 = vmatprep.subr.mxu0 0.0
        %1970 = vmatpush1.msra.mxu0 0.0
        %1971 = vmatprep.subr.mxu0 0.0
        %1972 = vmatpush1.msra.mxu0 0.0
        %1973 = vmatprep.subr.mxu0 0.0
        %1974 = vmatpush1.msra.mxu0 0.0
        %1975 = vmatprep.subr.mxu0 0.0
        %1976 = vmatpush1.msra.mxu0 0.0
        %1977 = vmatprep.subr.mxu0 0.0
        %1978 = vmatpush1.msra.mxu0 0.0
        %1979 = vmatprep.subr.mxu0 0.0
        %1980 = vmatpush1.msra.mxu0 0.0
        %1981 = vmatprep.subr.mxu0 0.0
        %1982 = vmatpush1.msra.mxu0 0.0
        %1983 = vmatprep.subr.mxu0 0.0
        %1984 = vmatpush1.msra.mxu0 0.0
        %1985 = vmatprep.subr.mxu0 0.0
        %1986 = vmatpush1.msra.mxu0 0.0
        %1987 = vmatprep.subr.mxu0 0.0
        %1988 = vmatpush1.msra.mxu0 0.0
        %1989 = vmatprep.subr.mxu0 0.0
        %1990 = vmatpush1.msra.mxu0 0.0
        %1991 = vmatprep.subr.mxu0 0.0
        %1992 = vmatpush1.msra.mxu0 0.0
        %1993 = vmatprep.subr.mxu0 0.0
        %1994 = vmatpush1.msra.mxu0 0.0
        %1995 = vmatprep.subr.mxu0 0.0
        %1996 = vmatpush1.msra.mxu0 0.0
        %1997 = vmatprep.subr.mxu0 0.0
        %1998 = vmatpush1.msra.mxu0 0.0
        %1999 = vmatprep.subr.mxu0 0.0
        %2000 = vmatpush1.msra.mxu0 0.0
        %2001 = vmatprep.subr.mxu0 0.0
        %2002 = vmatpush1.msra.mxu0 0.0
        %2003 = vmatprep.subr.mxu0 0.0
        %2004 = vmatpush1.msra.mxu0 0.0
        %2005 = vmatprep.subr.mxu0 0.0
        %2006 = vmatpush1.msra.mxu0 0.0
        %2007 = vmatprep.subr.mxu0 0.0
        %2008 = vmatpush1.msra.mxu0 0.0
        %2009 = vmatprep.subr.mxu0 0.0
        %2010 = vmatpush1.msra.mxu0 0.0
        %2011 = vmatprep.mubr.f32.mxu0 0.0
        %2012 = vmatmul.mubr.f32.gmra.mrb[0].mxu0 %v1945
        %v2013 = vpop.f32.mrb[0].mxu0
        %v2014 = vadd.f32 0.0, %v2013
        %v2015 = vpop.f32.mrb[0].mxu0
        %2016 = vdwg.mxu0
        %v2018 = vsel %vm1855, %v1931, 0
        %2020 = vmatprep.subr.mxu0 0.0
        %2021 = vmatpush1.msra.mxu0 %v1239
        %2022 = vmatprep.subr.mxu0 0.0
        %2023 = vmatpush1.msra.mxu0 0.0
        %2024 = vmatprep.subr.mxu0 0.0
        %2025 = vmatpush1.msra.mxu0 0.0
        %2026 = vmatprep.subr.mxu0 0.0
        %2027 = vmatpush1.msra.mxu0 0.0
        %2028 = vmatprep.subr.mxu0 0.0
        %2029 = vmatpush1.msra.mxu0 0.0
        %2030 = vmatprep.subr.mxu0 0.0
        %2031 = vmatpush1.msra.mxu0 0.0
        %2032 = vmatprep.subr.mxu0 0.0
        %2033 = vmatpush1.msra.mxu0 0.0
        %2034 = vmatprep.subr.mxu0 0.0
        %2035 = vmatpush1.msra.mxu0 0.0
        %2036 = vmatprep.subr.mxu0 0.0
        %2037 = vmatpush1.msra.mxu0 0.0
        %2038 = vmatprep.subr.mxu0 0.0
        %2039 = vmatpush1.msra.mxu0 0.0
        %2040 = vmatprep.subr.mxu0 0.0
        %2041 = vmatpush1.msra.mxu0 0.0
        %2042 = vmatprep.subr.mxu0 0.0
        %2043 = vmatpush1.msra.mxu0 0.0
        %2044 = vmatprep.subr.mxu0 0.0
        %2045 = vmatpush1.msra.mxu0 0.0
        %2046 = vmatprep.subr.mxu0 0.0
        %2047 = vmatpush1.msra.mxu0 0.0
        %2048 = vmatprep.subr.mxu0 0.0
        %2049 = vmatpush1.msra.mxu0 0.0
        %2050 = vmatprep.subr.mxu0 0.0
        %2051 = vmatpush1.msra.mxu0 0.0
        %2052 = vmatprep.subr.mxu0 0.0
        %2053 = vmatpush1.msra.mxu0 0.0
        %2054 = vmatprep.subr.mxu0 0.0
        %2055 = vmatpush1.msra.mxu0 0.0
        %2056 = vmatprep.subr.mxu0 0.0
        %2057 = vmatpush1.msra.mxu0 0.0
        %2058 = vmatprep.subr.mxu0 0.0
        %2059 = vmatpush1.msra.mxu0 0.0
        %2060 = vmatprep.subr.mxu0 0.0
        %2061 = vmatpush1.msra.mxu0 0.0
        %2062 = vmatprep.subr.mxu0 0.0
        %2063 = vmatpush1.msra.mxu0 0.0
        %2064 = vmatprep.subr.mxu0 0.0
        %2065 = vmatpush1.msra.mxu0 0.0
        %2066 = vmatprep.subr.mxu0 0.0
        %2067 = vmatpush1.msra.mxu0 0.0
        %2068 = vmatprep.subr.mxu0 0.0
        %2069 = vmatpush1.msra.mxu0 0.0
        %2070 = vmatprep.subr.mxu0 0.0
        %2071 = vmatpush1.msra.mxu0 0.0
        %2072 = vmatprep.subr.mxu0 0.0
        %2073 = vmatpush1.msra.mxu0 0.0
        %2074 = vmatprep.subr.mxu0 0.0
        %2075 = vmatpush1.msra.mxu0 0.0
        %2076 = vmatprep.subr.mxu0 0.0
        %2077 = vmatpush1.msra.mxu0 0.0
        %2078 = vmatprep.subr.mxu0 0.0
        %2079 = vmatpush1.msra.mxu0 0.0
        %2080 = vmatprep.subr.mxu0 0.0
        %2081 = vmatpush1.msra.mxu0 0.0
        %2082 = vmatprep.subr.mxu0 0.0
        %2083 = vmatpush1.msra.mxu0 0.0
        %2084 = vmatprep.mubr.f32.mxu0 0.0
        %2085 = vmatmul.mubr.f32.gmra.mrb[0].mxu0 %v2018
        %v2086 = vpop.f32.mrb[0].mxu0
        %v2087 = vadd.f32 0.0, %v2086
        %v2088 = vpop.f32.mrb[0].mxu0
        %2089 = vdwg.mxu0
        %v2091 = vsel %vm1855, %v1933, 0
        %2093 = vmatprep.subr.mxu0 0.0
        %2094 = vmatpush1.msra.mxu0 %v1240
        %2095 = vmatprep.subr.mxu0 0.0
        %2096 = vmatpush1.msra.mxu0 0.0
        %2097 = vmatprep.subr.mxu0 0.0
        %2098 = vmatpush1.msra.mxu0 0.0
        %2099 = vmatprep.subr.mxu0 0.0
        %2100 = vmatpush1.msra.mxu0 0.0
        %2101 = vmatprep.subr.mxu0 0.0
        %2102 = vmatpush1.msra.mxu0 0.0
        %2103 = vmatprep.subr.mxu0 0.0
        %2104 = vmatpush1.msra.mxu0 0.0
        %2105 = vmatprep.subr.mxu0 0.0
        %2106 = vmatpush1.msra.mxu0 0.0
        %2107 = vmatprep.subr.mxu0 0.0
        %2108 = vmatpush1.msra.mxu0 0.0
        %2109 = vmatprep.subr.mxu0 0.0
        %2110 = vmatpush1.msra.mxu0 0.0
        %2111 = vmatprep.subr.mxu0 0.0
        %2112 = vmatpush1.msra.mxu0 0.0
        %2113 = vmatprep.subr.mxu0 0.0
        %2114 = vmatpush1.msra.mxu0 0.0
        %2115 = vmatprep.subr.mxu0 0.0
        %2116 = vmatpush1.msra.mxu0 0.0
        %2117 = vmatprep.subr.mxu0 0.0
        %2118 = vmatpush1.msra.mxu0 0.0
        %2119 = vmatprep.subr.mxu0 0.0
        %2120 = vmatpush1.msra.mxu0 0.0
        %2121 = vmatprep.subr.mxu0 0.0
        %2122 = vmatpush1.msra.mxu0 0.0
        %2123 = vmatprep.subr.mxu0 0.0
        %2124 = vmatpush1.msra.mxu0 0.0
        %2125 = vmatprep.subr.mxu0 0.0
        %2126 = vmatpush1.msra.mxu0 0.0
        %2127 = vmatprep.subr.mxu0 0.0
        %2128 = vmatpush1.msra.mxu0 0.0
        %2129 = vmatprep.subr.mxu0 0.0
        %2130 = vmatpush1.msra.mxu0 0.0
        %2131 = vmatprep.subr.mxu0 0.0
        %2132 = vmatpush1.msra.mxu0 0.0
        %2133 = vmatprep.subr.mxu0 0.0
        %2134 = vmatpush1.msra.mxu0 0.0
        %2135 = vmatprep.subr.mxu0 0.0
        %2136 = vmatpush1.msra.mxu0 0.0
        %2137 = vmatprep.subr.mxu0 0.0
        %2138 = vmatpush1.msra.mxu0 0.0
        %2139 = vmatprep.subr.mxu0 0.0
        %2140 = vmatpush1.msra.mxu0 0.0
        %2141 = vmatprep.subr.mxu0 0.0
        %2142 = vmatpush1.msra.mxu0 0.0
        %2143 = vmatprep.subr.mxu0 0.0
        %2144 = vmatpush1.msra.mxu0 0.0
        %2145 = vmatprep.subr.mxu0 0.0
        %2146 = vmatpush1.msra.mxu0 0.0
        %2147 = vmatprep.subr.mxu0 0.0
        %2148 = vmatpush1.msra.mxu0 0.0
        %2149 = vmatprep.subr.mxu0 0.0
        %2150 = vmatpush1.msra.mxu0 0.0
        %2151 = vmatprep.subr.mxu0 0.0
        %2152 = vmatpush1.msra.mxu0 0.0
        %2153 = vmatprep.subr.mxu0 0.0
        %2154 = vmatpush1.msra.mxu0 0.0
        %2155 = vmatprep.subr.mxu0 0.0
        %2156 = vmatpush1.msra.mxu0 0.0
        %2157 = vmatprep.mubr.f32.mxu0 0.0
        %2158 = vmatmul.mubr.f32.gmra.mrb[0].mxu0 %v2091
        %v2159 = vpop.f32.mrb[0].mxu0
        %v2160 = vadd.f32 0.0, %v2159
        %v2161 = vpop.f32.mrb[0].mxu0
        %2162 = vdwg.mxu0
        %v2164 = vsel %vm1855, %v1935, 0
        %2166 = vmatprep.subr.mxu0 0.0
        %2167 = vmatpush1.msra.mxu0 %v1241
        %2168 = vmatprep.subr.mxu0 0.0
        %2169 = vmatpush1.msra.mxu0 0.0
        %2170 = vmatprep.subr.mxu0 0.0
        %2171 = vmatpush1.msra.mxu0 0.0
        %2172 = vmatprep.subr.mxu0 0.0
        %2173 = vmatpush1.msra.mxu0 0.0
        %2174 = vmatprep.subr.mxu0 0.0
        %2175 = vmatpush1.msra.mxu0 0.0
        %2176 = vmatprep.subr.mxu0 0.0
        %2177 = vmatpush1.msra.mxu0 0.0
        %2178 = vmatprep.subr.mxu0 0.0
        %2179 = vmatpush1.msra.mxu0 0.0
        %2180 = vmatprep.subr.mxu0 0.0
        %2181 = vmatpush1.msra.mxu0 0.0
        %2182 = vmatprep.subr.mxu0 0.0
        %2183 = vmatpush1.msra.mxu0 0.0
        %2184 = vmatprep.subr.mxu0 0.0
        %2185 = vmatpush1.msra.mxu0 0.0
        %2186 = vmatprep.subr.mxu0 0.0
        %2187 = vmatpush1.msra.mxu0 0.0
        %2188 = vmatprep.subr.mxu0 0.0
        %2189 = vmatpush1.msra.mxu0 0.0
        %2190 = vmatprep.subr.mxu0 0.0
        %2191 = vmatpush1.msra.mxu0 0.0
        %2192 = vmatprep.subr.mxu0 0.0
        %2193 = vmatpush1.msra.mxu0 0.0
        %2194 = vmatprep.subr.mxu0 0.0
        %2195 = vmatpush1.msra.mxu0 0.0
        %2196 = vmatprep.subr.mxu0 0.0
        %2197 = vmatpush1.msra.mxu0 0.0
        %2198 = vmatprep.subr.mxu0 0.0
        %2199 = vmatpush1.msra.mxu0 0.0
        %2200 = vmatprep.subr.mxu0 0.0
        %2201 = vmatpush1.msra.mxu0 0.0
        %2202 = vmatprep.subr.mxu0 0.0
        %2203 = vmatpush1.msra.mxu0 0.0
        %2204 = vmatprep.subr.mxu0 0.0
        %2205 = vmatpush1.msra.mxu0 0.0
        %2206 = vmatprep.subr.mxu0 0.0
        %2207 = vmatpush1.msra.mxu0 0.0
        %2208 = vmatprep.subr.mxu0 0.0
        %2209 = vmatpush1.msra.mxu0 0.0
        %2210 = vmatprep.subr.mxu0 0.0
        %2211 = vmatpush1.msra.mxu0 0.0
        %2212 = vmatprep.subr.mxu0 0.0
        %2213 = vmatpush1.msra.mxu0 0.0
        %2214 = vmatprep.subr.mxu0 0.0
        %2215 = vmatpush1.msra.mxu0 0.0
        %2216 = vmatprep.subr.mxu0 0.0
        %2217 = vmatpush1.msra.mxu0 0.0
        %2218 = vmatprep.subr.mxu0 0.0
        %2219 = vmatpush1.msra.mxu0 0.0
        %2220 = vmatprep.subr.mxu0 0.0
        %2221 = vmatpush1.msra.mxu0 0.0
        %2222 = vmatprep.subr.mxu0 0.0
        %2223 = vmatpush1.msra.mxu0 0.0
        %2224 = vmatprep.subr.mxu0 0.0
        %2225 = vmatpush1.msra.mxu0 0.0
        %2226 = vmatprep.subr.mxu0 0.0
        %2227 = vmatpush1.msra.mxu0 0.0
        %2228 = vmatprep.subr.mxu0 0.0
        %2229 = vmatpush1.msra.mxu0 0.0
        %2230 = vmatprep.mubr.f32.mxu0 0.0
        %2231 = vmatmul.mubr.f32.gmra.mrb[0].mxu0 %v2164
        %v2232 = vpop.f32.mrb[0].mxu0
        %v2233 = vadd.f32 0.0, %v2232
        %v2234 = vpop.f32.mrb[0].mxu0
        %2235 = vdwg.mxu0
        %v2237 = vsel %vm1855, %v1937, 0
        %2239 = vmatprep.subr.mxu0 0.0
        %2240 = vmatpush1.msra.mxu0 %v1242
        %2241 = vmatprep.subr.mxu0 0.0
        %2242 = vmatpush1.msra.mxu0 0.0
        %2243 = vmatprep.subr.mxu0 0.0
        %2244 = vmatpush1.msra.mxu0 0.0
        %2245 = vmatprep.subr.mxu0 0.0
        %2246 = vmatpush1.msra.mxu0 0.0
        %2247 = vmatprep.subr.mxu0 0.0
        %2248 = vmatpush1.msra.mxu0 0.0
        %2249 = vmatprep.subr.mxu0 0.0
        %2250 = vmatpush1.msra.mxu0 0.0
        %2251 = vmatprep.subr.mxu0 0.0
        %2252 = vmatpush1.msra.mxu0 0.0
        %2253 = vmatprep.subr.mxu0 0.0
        %2254 = vmatpush1.msra.mxu0 0.0
        %2255 = vmatprep.subr.mxu0 0.0
        %2256 = vmatpush1.msra.mxu0 0.0
        %2257 = vmatprep.subr.mxu0 0.0
        %2258 = vmatpush1.msra.mxu0 0.0
        %2259 = vmatprep.subr.mxu0 0.0
        %2260 = vmatpush1.msra.mxu0 0.0
        %2261 = vmatprep.subr.mxu0 0.0
        %2262 = vmatpush1.msra.mxu0 0.0
        %2263 = vmatprep.subr.mxu0 0.0
        %2264 = vmatpush1.msra.mxu0 0.0
        %2265 = vmatprep.subr.mxu0 0.0
        %2266 = vmatpush1.msra.mxu0 0.0
        %2267 = vmatprep.subr.mxu0 0.0
        %2268 = vmatpush1.msra.mxu0 0.0
        %2269 = vmatprep.subr.mxu0 0.0
        %2270 = vmatpush1.msra.mxu0 0.0
        %2271 = vmatprep.subr.mxu0 0.0
        %2272 = vmatpush1.msra.mxu0 0.0
        %2273 = vmatprep.subr.mxu0 0.0
        %2274 = vmatpush1.msra.mxu0 0.0
        %2275 = vmatprep.subr.mxu0 0.0
        %2276 = vmatpush1.msra.mxu0 0.0
        %2277 = vmatprep.subr.mxu0 0.0
        %2278 = vmatpush1.msra.mxu0 0.0
        %2279 = vmatprep.subr.mxu0 0.0
        %2280 = vmatpush1.msra.mxu0 0.0
        %2281 = vmatprep.subr.mxu0 0.0
        %2282 = vmatpush1.msra.mxu0 0.0
        %2283 = vmatprep.subr.mxu0 0.0
        %2284 = vmatpush1.msra.mxu0 0.0
        %2285 = vmatprep.subr.mxu0 0.0
        %2286 = vmatpush1.msra.mxu0 0.0
        %2287 = vmatprep.subr.mxu0 0.0
        %2288 = vmatpush1.msra.mxu0 0.0
        %2289 = vmatprep.subr.mxu0 0.0
        %2290 = vmatpush1.msra.mxu0 0.0
        %2291 = vmatprep.subr.mxu0 0.0
        %2292 = vmatpush1.msra.mxu0 0.0
        %2293 = vmatprep.subr.mxu0 0.0
        %2294 = vmatpush1.msra.mxu0 0.0
        %2295 = vmatprep.subr.mxu0 0.0
        %2296 = vmatpush1.msra.mxu0 0.0
        %2297 = vmatprep.subr.mxu0 0.0
        %2298 = vmatpush1.msra.mxu0 0.0
        %2299 = vmatprep.subr.mxu0 0.0
        %2300 = vmatpush1.msra.mxu0 0.0
        %2301 = vmatprep.subr.mxu0 0.0
        %2302 = vmatpush1.msra.mxu0 0.0
        %2303 = vmatprep.mubr.f32.mxu0 0.0
        %2304 = vmatmul.mubr.f32.gmra.mrb[0].mxu0 %v2237
        %v2305 = vpop.f32.mrb[0].mxu0
        %v2306 = vadd.f32 0.0, %v2305
        %v2307 = vpop.f32.mrb[0].mxu0
        %2308 = vdwg.mxu0
        %v2310 = vsel %vm1855, %v1939, 0
        %2312 = vmatprep.subr.mxu0 0.0
        %2313 = vmatpush1.msra.mxu0 %v1243
        %2314 = vmatprep.subr.mxu0 0.0
        %2315 = vmatpush1.msra.mxu0 0.0
        %2316 = vmatprep.subr.mxu0 0.0
        %2317 = vmatpush1.msra.mxu0 0.0
        %2318 = vmatprep.subr.mxu0 0.0
        %2319 = vmatpush1.msra.mxu0 0.0
        %2320 = vmatprep.subr.mxu0 0.0
        %2321 = vmatpush1.msra.mxu0 0.0
        %2322 = vmatprep.subr.mxu0 0.0
        %2323 = vmatpush1.msra.mxu0 0.0
        %2324 = vmatprep.subr.mxu0 0.0
        %2325 = vmatpush1.msra.mxu0 0.0
        %2326 = vmatprep.subr.mxu0 0.0
        %2327 = vmatpush1.msra.mxu0 0.0
        %2328 = vmatprep.subr.mxu0 0.0
        %2329 = vmatpush1.msra.mxu0 0.0
        %2330 = vmatprep.subr.mxu0 0.0
        %2331 = vmatpush1.msra.mxu0 0.0
        %2332 = vmatprep.subr.mxu0 0.0
        %2333 = vmatpush1.msra.mxu0 0.0
        %2334 = vmatprep.subr.mxu0 0.0
        %2335 = vmatpush1.msra.mxu0 0.0
        %2336 = vmatprep.subr.mxu0 0.0
        %2337 = vmatpush1.msra.mxu0 0.0
        %2338 = vmatprep.subr.mxu0 0.0
        %2339 = vmatpush1.msra.mxu0 0.0
        %2340 = vmatprep.subr.mxu0 0.0
        %2341 = vmatpush1.msra.mxu0 0.0
        %2342 = vmatprep.subr.mxu0 0.0
        %2343 = vmatpush1.msra.mxu0 0.0
        %2344 = vmatprep.subr.mxu0 0.0
        %2345 = vmatpush1.msra.mxu0 0.0
        %2346 = vmatprep.subr.mxu0 0.0
        %2347 = vmatpush1.msra.mxu0 0.0
        %2348 = vmatprep.subr.mxu0 0.0
        %2349 = vmatpush1.msra.mxu0 0.0
        %2350 = vmatprep.subr.mxu0 0.0
        %2351 = vmatpush1.msra.mxu0 0.0
        %2352 = vmatprep.subr.mxu0 0.0
        %2353 = vmatpush1.msra.mxu0 0.0
        %2354 = vmatprep.subr.mxu0 0.0
        %2355 = vmatpush1.msra.mxu0 0.0
        %2356 = vmatprep.subr.mxu0 0.0
        %2357 = vmatpush1.msra.mxu0 0.0
        %2358 = vmatprep.subr.mxu0 0.0
        %2359 = vmatpush1.msra.mxu0 0.0
        %2360 = vmatprep.subr.mxu0 0.0
        %2361 = vmatpush1.msra.mxu0 0.0
        %2362 = vmatprep.subr.mxu0 0.0
        %2363 = vmatpush1.msra.mxu0 0.0
        %2364 = vmatprep.subr.mxu0 0.0
        %2365 = vmatpush1.msra.mxu0 0.0
        %2366 = vmatprep.subr.mxu0 0.0
        %2367 = vmatpush1.msra.mxu0 0.0
        %2368 = vmatprep.subr.mxu0 0.0
        %2369 = vmatpush1.msra.mxu0 0.0
        %2370 = vmatprep.subr.mxu0 0.0
        %2371 = vmatpush1.msra.mxu0 0.0
        %2372 = vmatprep.subr.mxu0 0.0
        %2373 = vmatpush1.msra.mxu0 0.0
        %2374 = vmatprep.subr.mxu0 0.0
        %2375 = vmatpush1.msra.mxu0 0.0
        %2376 = vmatprep.mubr.f32.mxu0 0.0
        %2377 = vmatmul.mubr.f32.gmra.mrb[0].mxu0 %v2310
        %v2378 = vpop.f32.mrb[0].mxu0
        %v2379 = vadd.f32 0.0, %v2378
        %v2380 = vpop.f32.mrb[0].mxu0
        %2381 = vdwg.mxu0
        %v2383 = vsel %vm1855, %v1941, 0
        %2385 = vmatprep.subr.mxu0 0.0
        %2386 = vmatpush1.msra.mxu0 %v1244
        %2387 = vmatprep.subr.mxu0 0.0
        %2388 = vmatpush1.msra.mxu0 0.0
        %2389 = vmatprep.subr.mxu0 0.0
        %2390 = vmatpush1.msra.mxu0 0.0
        %2391 = vmatprep.subr.mxu0 0.0
        %2392 = vmatpush1.msra.mxu0 0.0
        %2393 = vmatprep.subr.mxu0 0.0
        %2394 = vmatpush1.msra.mxu0 0.0
        %2395 = vmatprep.subr.mxu0 0.0
        %2396 = vmatpush1.msra.mxu0 0.0
        %2397 = vmatprep.subr.mxu0 0.0
        %2398 = vmatpush1.msra.mxu0 0.0
        %2399 = vmatprep.subr.mxu0 0.0
        %2400 = vmatpush1.msra.mxu0 0.0
        %2401 = vmatprep.subr.mxu0 0.0
        %2402 = vmatpush1.msra.mxu0 0.0
        %2403 = vmatprep.subr.mxu0 0.0
        %2404 = vmatpush1.msra.mxu0 0.0
        %2405 = vmatprep.subr.mxu0 0.0
        %2406 = vmatpush1.msra.mxu0 0.0
        %2407 = vmatprep.subr.mxu0 0.0
        %2408 = vmatpush1.msra.mxu0 0.0
        %2409 = vmatprep.subr.mxu0 0.0
        %2410 = vmatpush1.msra.mxu0 0.0
        %2411 = vmatprep.subr.mxu0 0.0
        %2412 = vmatpush1.msra.mxu0 0.0
        %2413 = vmatprep.subr.mxu0 0.0
        %2414 = vmatpush1.msra.mxu0 0.0
        %2415 = vmatprep.subr.mxu0 0.0
        %2416 = vmatpush1.msra.mxu0 0.0
        %2417 = vmatprep.subr.mxu0 0.0
        %2418 = vmatpush1.msra.mxu0 0.0
        %2419 = vmatprep.subr.mxu0 0.0
        %2420 = vmatpush1.msra.mxu0 0.0
        %2421 = vmatprep.subr.mxu0 0.0
        %2422 = vmatpush1.msra.mxu0 0.0
        %2423 = vmatprep.subr.mxu0 0.0
        %2424 = vmatpush1.msra.mxu0 0.0
        %2425 = vmatprep.subr.mxu0 0.0
        %2426 = vmatpush1.msra.mxu0 0.0
        %2427 = vmatprep.subr.mxu0 0.0
        %2428 = vmatpush1.msra.mxu0 0.0
        %2429 = vmatprep.subr.mxu0 0.0
        %2430 = vmatpush1.msra.mxu0 0.0
        %2431 = vmatprep.subr.mxu0 0.0
        %2432 = vmatpush1.msra.mxu0 0.0
        %2433 = vmatprep.subr.mxu0 0.0
        %2434 = vmatpush1.msra.mxu0 0.0
        %2435 = vmatprep.subr.mxu0 0.0
        %2436 = vmatpush1.msra.mxu0 0.0
        %2437 = vmatprep.subr.mxu0 0.0
        %2438 = vmatpush1.msra.mxu0 0.0
        %2439 = vmatprep.subr.mxu0 0.0
        %2440 = vmatpush1.msra.mxu0 0.0
        %2441 = vmatprep.subr.mxu0 0.0
        %2442 = vmatpush1.msra.mxu0 0.0
        %2443 = vmatprep.subr.mxu0 0.0
        %2444 = vmatpush1.msra.mxu0 0.0
        %2445 = vmatprep.subr.mxu0 0.0
        %2446 = vmatpush1.msra.mxu0 0.0
        %2447 = vmatprep.subr.mxu0 0.0
        %2448 = vmatpush1.msra.mxu0 0.0
        %2449 = vmatprep.mubr.f32.mxu0 0.0
        %2450 = vmatmul.mubr.f32.gmra.mrb[0].mxu0 %v2383
        %v2451 = vpop.f32.mrb[0].mxu0
        %v2452 = vadd.f32 0.0, %v2451
        %v2453 = vpop.f32.mrb[0].mxu0
        %2454 = vdwg.mxu0
        %v2456 = vsel %vm1855, %v1943, 0
        %2458 = vmatprep.subr.mxu0 0.0
        %2459 = vmatpush1.msra.mxu0 %v1245
        %2460 = vmatprep.subr.mxu0 0.0
        %2461 = vmatpush1.msra.mxu0 0.0
        %2462 = vmatprep.subr.mxu0 0.0
        %2463 = vmatpush1.msra.mxu0 0.0
        %2464 = vmatprep.subr.mxu0 0.0
        %2465 = vmatpush1.msra.mxu0 0.0
        %2466 = vmatprep.subr.mxu0 0.0
        %2467 = vmatpush1.msra.mxu0 0.0
        %2468 = vmatprep.subr.mxu0 0.0
        %2469 = vmatpush1.msra.mxu0 0.0
        %2470 = vmatprep.subr.mxu0 0.0
        %2471 = vmatpush1.msra.mxu0 0.0
        %2472 = vmatprep.subr.mxu0 0.0
        %2473 = vmatpush1.msra.mxu0 0.0
        %2474 = vmatprep.subr.mxu0 0.0
        %2475 = vmatpush1.msra.mxu0 0.0
        %2476 = vmatprep.subr.mxu0 0.0
        %2477 = vmatpush1.msra.mxu0 0.0
        %2478 = vmatprep.subr.mxu0 0.0
        %2479 = vmatpush1.msra.mxu0 0.0
        %2480 = vmatprep.subr.mxu0 0.0
        %2481 = vmatpush1.msra.mxu0 0.0
        %2482 = vmatprep.subr.mxu0 0.0
        %2483 = vmatpush1.msra.mxu0 0.0
        %2484 = vmatprep.subr.mxu0 0.0
        %2485 = vmatpush1.msra.mxu0 0.0
        %2486 = vmatprep.subr.mxu0 0.0
        %2487 = vmatpush1.msra.mxu0 0.0
        %2488 = vmatprep.subr.mxu0 0.0
        %2489 = vmatpush1.msra.mxu0 0.0
        %2490 = vmatprep.subr.mxu0 0.0
        %2491 = vmatpush1.msra.mxu0 0.0
        %2492 = vmatprep.subr.mxu0 0.0
        %2493 = vmatpush1.msra.mxu0 0.0
        %2494 = vmatprep.subr.mxu0 0.0
        %2495 = vmatpush1.msra.mxu0 0.0
        %2496 = vmatprep.subr.mxu0 0.0
        %2497 = vmatpush1.msra.mxu0 0.0
        %2498 = vmatprep.subr.mxu0 0.0
        %2499 = vmatpush1.msra.mxu0 0.0
        %2500 = vmatprep.subr.mxu0 0.0
        %2501 = vmatpush1.msra.mxu0 0.0
        %2502 = vmatprep.subr.mxu0 0.0
        %2503 = vmatpush1.msra.mxu0 0.0
        %2504 = vmatprep.subr.mxu0 0.0
        %2505 = vmatpush1.msra.mxu0 0.0
        %2506 = vmatprep.subr.mxu0 0.0
        %2507 = vmatpush1.msra.mxu0 0.0
        %2508 = vmatprep.subr.mxu0 0.0
        %2509 = vmatpush1.msra.mxu0 0.0
        %2510 = vmatprep.subr.mxu0 0.0
        %2511 = vmatpush1.msra.mxu0 0.0
        %2512 = vmatprep.subr.mxu0 0.0
        %2513 = vmatpush1.msra.mxu0 0.0
        %2514 = vmatprep.subr.mxu0 0.0
        %2515 = vmatpush1.msra.mxu0 0.0
        %2516 = vmatprep.subr.mxu0 0.0
        %2517 = vmatpush1.msra.mxu0 0.0
        %2518 = vmatprep.subr.mxu0 0.0
        %2519 = vmatpush1.msra.mxu0 0.0
        %2520 = vmatprep.subr.mxu0 0.0
        %2521 = vmatpush1.msra.mxu0 0.0
        %2522 = vmatprep.mubr.f32.mxu0 0.0
        %2523 = vmatmul.mubr.f32.gmra.mrb[0].mxu0 %v2456
        %v2524 = vpop.f32.mrb[0].mxu0
        %v2525 = vadd.f32 0.0, %v2524
        %v2526 = vpop.f32.mrb[0].mxu0
        %2527 = vdwg.mxu0
        %v2528 = vcombine.low %v2014, %v2160
        %v2529 = vcombine.high %v2014, %v2160
        %v2531 = vunpack.c.l.s4 1983009808
        %v2532 = vunpack.c.0.s8 %v2531
        %v2533 = vlaneseq
        %v2534 = vshrl.u32 %v2533, 7
        %v2535 = vsub.s32 %v2532, %v2534
        %v2536 = vrot.slane %v2528, %v2535
        %v2538 = vunpack.c.l.s4 1983009808
        %v2539 = vunpack.c.0.s8 %v2538
        %v2540 = vlaneseq
        %v2541 = vshrl.u32 %v2540, 7
        %v2542 = vsub.s32 %v2539, %v2541
        %v2543 = vrot.slane %v2529, %v2542
        %v2544 = vcombine.low %v2087, %v2233
        %v2545 = vcombine.high %v2087, %v2233
        %v2547 = vunpack.c.l.s4 1983009808
        %v2548 = vunpack.c.0.s8 %v2547
        %v2549 = vlaneseq
        %v2550 = vshrl.u32 %v2549, 7
        %v2551 = vsub.s32 %v2548, %v2550
        %v2552 = vrot.slane %v2544, %v2551
        %v2554 = vunpack.c.l.s4 1983009808
        %v2555 = vunpack.c.0.s8 %v2554
        %v2556 = vlaneseq
        %v2557 = vshrl.u32 %v2556, 7
        %v2558 = vsub.s32 %v2555, %v2557
        %v2559 = vrot.slane %v2545, %v2558
        %v2560 = vcombine.low %v2306, %v2452
        %v2561 = vcombine.high %v2306, %v2452
        %v2563 = vunpack.c.l.s4 1983009808
        %v2564 = vunpack.c.0.s8 %v2563
        %v2565 = vlaneseq
        %v2566 = vshrl.u32 %v2565, 7
        %v2567 = vsub.s32 %v2564, %v2566
        %v2568 = vrot.slane %v2560, %v2567
        %v2570 = vunpack.c.l.s4 1983009808
        %v2571 = vunpack.c.0.s8 %v2570
        %v2572 = vlaneseq
        %v2573 = vshrl.u32 %v2572, 7
        %v2574 = vsub.s32 %v2571, %v2573
        %v2575 = vrot.slane %v2561, %v2574
        %v2576 = vcombine.low %v2379, %v2525
        %v2577 = vcombine.high %v2379, %v2525
        %v2579 = vunpack.c.l.s4 1983009808
        %v2580 = vunpack.c.0.s8 %v2579
        %v2581 = vlaneseq
        %v2582 = vshrl.u32 %v2581, 7
        %v2583 = vsub.s32 %v2580, %v2582
        %v2584 = vrot.slane %v2576, %v2583
        %v2586 = vunpack.c.l.s4 1983009808
        %v2587 = vunpack.c.0.s8 %v2586
        %v2588 = vlaneseq
        %v2589 = vshrl.u32 %v2588, 7
        %v2590 = vsub.s32 %v2587, %v2589
        %v2591 = vrot.slane %v2577, %v2590
        %v2592 = vcombine.low %v2536, %v2552
        %v2593 = vcombine.high %v2536, %v2552
        %v2595 = vunpack.c.l.s4 1934713408
        %v2596 = vunpack.c.0.s8 %v2595
        %v2597 = vlaneseq
        %v2598 = vshrl.u32 %v2597, 7
        %v2599 = vsub.s32 %v2596, %v2598
        %v2600 = vrot.slane %v2592, %v2599
        %v2602 = vunpack.c.l.s4 1934713408
        %v2603 = vunpack.c.0.s8 %v2602
        %v2604 = vlaneseq
        %v2605 = vshrl.u32 %v2604, 7
        %v2606 = vsub.s32 %v2603, %v2605
        %v2607 = vrot.slane %v2593, %v2606
        %v2608 = vcombine.low %v2543, %v2559
        %v2609 = vcombine.high %v2543, %v2559
        %v2611 = vunpack.c.l.s4 1934713408
        %v2612 = vunpack.c.0.s8 %v2611
        %v2613 = vlaneseq
        %v2614 = vshrl.u32 %v2613, 7
        %v2615 = vsub.s32 %v2612, %v2614
        %v2616 = vrot.slane %v2608, %v2615
        %v2618 = vunpack.c.l.s4 1934713408
        %v2619 = vunpack.c.0.s8 %v2618
        %v2620 = vlaneseq
        %v2621 = vshrl.u32 %v2620, 7
        %v2622 = vsub.s32 %v2619, %v2621
        %v2623 = vrot.slane %v2609, %v2622
        %v2624 = vcombine.low %v2568, %v2584
        %v2625 = vcombine.high %v2568, %v2584
        %v2627 = vunpack.c.l.s4 1934713408
        %v2628 = vunpack.c.0.s8 %v2627
        %v2629 = vlaneseq
        %v2630 = vshrl.u32 %v2629, 7
        %v2631 = vsub.s32 %v2628, %v2630
        %v2632 = vrot.slane %v2624, %v2631
        %v2634 = vunpack.c.l.s4 1934713408
        %v2635 = vunpack.c.0.s8 %v2634
        %v2636 = vlaneseq
        %v2637 = vshrl.u32 %v2636, 7
        %v2638 = vsub.s32 %v2635, %v2637
        %v2639 = vrot.slane %v2625, %v2638
        %v2640 = vcombine.low %v2575, %v2591
        %v2641 = vcombine.high %v2575, %v2591
        %v2643 = vunpack.c.l.s4 1934713408
        %v2644 = vunpack.c.0.s8 %v2643
        %v2645 = vlaneseq
        %v2646 = vshrl.u32 %v2645, 7
        %v2647 = vsub.s32 %v2644, %v2646
        %v2648 = vrot.slane %v2640, %v2647
        %v2650 = vunpack.c.l.s4 1934713408
        %v2651 = vunpack.c.0.s8 %v2650
        %v2652 = vlaneseq
        %v2653 = vshrl.u32 %v2652, 7
        %v2654 = vsub.s32 %v2651, %v2653
        %v2655 = vrot.slane %v2641, %v2654
        %v2656 = vcombine.low %v2600, %v2632
        %v2657 = vcombine.high %v2600, %v2632
        %v2658 = vcombine.low %v2607, %v2639
        %v2659 = vcombine.high %v2607, %v2639
        %v2660 = vcombine.low %v2616, %v2648
        %v2661 = vcombine.high %v2616, %v2648
        %v2662 = vcombine.low %v2623, %v2655
        %v2663 = vcombine.high %v2623, %v2655
        %v2664 = vcombine.low %v2656, %v2658
        %v2665 = vcombine.high %v2656, %v2658
        %v2667 = vunpack.c.l.s4 1983009808
        %v2668 = vunpack.c.0.s8 %v2667
        %v2669 = vlaneseq
        %v2670 = vshrl.u32 %v2669, 7
        %v2671 = vsub.s32 %v2668, %v2670
        %v2672 = vrot.slane %v2664, %v2671
        %v2674 = vunpack.c.l.s4 1983009808
        %v2675 = vunpack.c.0.s8 %v2674
        %v2676 = vlaneseq
        %v2677 = vshrl.u32 %v2676, 7
        %v2678 = vsub.s32 %v2675, %v2677
        %v2679 = vrot.slane %v2665, %v2678
        %v2680 = vcombine.low %v2657, %v2659
        %v2681 = vcombine.high %v2657, %v2659
        %v2683 = vunpack.c.l.s4 1983009808
        %v2684 = vunpack.c.0.s8 %v2683
        %v2685 = vlaneseq
        %v2686 = vshrl.u32 %v2685, 7
        %v2687 = vsub.s32 %v2684, %v2686
        %v2688 = vrot.slane %v2680, %v2687
        %v2690 = vunpack.c.l.s4 1983009808
        %v2691 = vunpack.c.0.s8 %v2690
        %v2692 = vlaneseq
        %v2693 = vshrl.u32 %v2692, 7
        %v2694 = vsub.s32 %v2691, %v2693
        %v2695 = vrot.slane %v2681, %v2694
        %v2696 = vcombine.low %v2660, %v2662
        %v2697 = vcombine.high %v2660, %v2662
        %v2699 = vunpack.c.l.s4 1983009808
        %v2700 = vunpack.c.0.s8 %v2699
        %v2701 = vlaneseq
        %v2702 = vshrl.u32 %v2701, 7
        %v2703 = vsub.s32 %v2700, %v2702
        %v2704 = vrot.slane %v2696, %v2703
        %v2706 = vunpack.c.l.s4 1983009808
        %v2707 = vunpack.c.0.s8 %v2706
        %v2708 = vlaneseq
        %v2709 = vshrl.u32 %v2708, 7
        %v2710 = vsub.s32 %v2707, %v2709
        %v2711 = vrot.slane %v2697, %v2710
        %v2712 = vcombine.low %v2661, %v2663
        %v2713 = vcombine.high %v2661, %v2663
        %v2715 = vunpack.c.l.s4 1983009808
        %v2716 = vunpack.c.0.s8 %v2715
        %v2717 = vlaneseq
        %v2718 = vshrl.u32 %v2717, 7
        %v2719 = vsub.s32 %v2716, %v2718
        %v2720 = vrot.slane %v2712, %v2719
        %v2722 = vunpack.c.l.s4 1983009808
        %v2723 = vunpack.c.0.s8 %v2722
        %v2724 = vlaneseq
        %v2725 = vshrl.u32 %v2724, 7
        %v2726 = vsub.s32 %v2723, %v2725
        %v2727 = vrot.slane %v2713, %v2726
        %v2728 = vcombine.low %v2672, %v2688
        %v2729 = vcombine.high %v2672, %v2688
        %v2731 = vunpack.c.l.s4 1934713408
        %v2732 = vunpack.c.0.s8 %v2731
        %v2733 = vlaneseq
        %v2734 = vshrl.u32 %v2733, 7
        %v2735 = vsub.s32 %v2732, %v2734
        %v2736 = vrot.slane %v2728, %v2735
        %v2738 = vunpack.c.l.s4 1934713408
        %v2739 = vunpack.c.0.s8 %v2738
        %v2740 = vlaneseq
        %v2741 = vshrl.u32 %v2740, 7
        %v2742 = vsub.s32 %v2739, %v2741
        %v2743 = vrot.slane %v2729, %v2742
        %v2744 = vcombine.low %v2679, %v2695
        %v2745 = vcombine.high %v2679, %v2695
        %v2747 = vunpack.c.l.s4 1934713408
        %v2748 = vunpack.c.0.s8 %v2747
        %v2749 = vlaneseq
        %v2750 = vshrl.u32 %v2749, 7
        %v2751 = vsub.s32 %v2748, %v2750
        %v2752 = vrot.slane %v2744, %v2751
        %v2754 = vunpack.c.l.s4 1934713408
        %v2755 = vunpack.c.0.s8 %v2754
        %v2756 = vlaneseq
        %v2757 = vshrl.u32 %v2756, 7
        %v2758 = vsub.s32 %v2755, %v2757
        %v2759 = vrot.slane %v2745, %v2758
        %v2760 = vcombine.low %v2704, %v2720
        %v2761 = vcombine.high %v2704, %v2720
        %v2763 = vunpack.c.l.s4 1934713408
        %v2764 = vunpack.c.0.s8 %v2763
        %v2765 = vlaneseq
        %v2766 = vshrl.u32 %v2765, 7
        %v2767 = vsub.s32 %v2764, %v2766
        %v2768 = vrot.slane %v2760, %v2767
        %v2770 = vunpack.c.l.s4 1934713408
        %v2771 = vunpack.c.0.s8 %v2770
        %v2772 = vlaneseq
        %v2773 = vshrl.u32 %v2772, 7
        %v2774 = vsub.s32 %v2771, %v2773
        %v2775 = vrot.slane %v2761, %v2774
        %v2776 = vcombine.low %v2711, %v2727
        %v2777 = vcombine.high %v2711, %v2727
        %v2779 = vunpack.c.l.s4 1934713408
        %v2780 = vunpack.c.0.s8 %v2779
        %v2781 = vlaneseq
        %v2782 = vshrl.u32 %v2781, 7
        %v2783 = vsub.s32 %v2780, %v2782
        %v2784 = vrot.slane %v2776, %v2783
        %v2786 = vunpack.c.l.s4 1934713408
        %v2787 = vunpack.c.0.s8 %v2786
        %v2788 = vlaneseq
        %v2789 = vshrl.u32 %v2788, 7
        %v2790 = vsub.s32 %v2787, %v2789
        %v2791 = vrot.slane %v2777, %v2790
        %v2792 = vcombine.low %v2736, %v2768
        %v2793 = vcombine.high %v2736, %v2768
        %v2794 = vcombine.low %v2743, %v2775
        %v2795 = vcombine.high %v2743, %v2775
        %v2796 = vcombine.low %v2752, %v2784
        %v2797 = vcombine.high %v2752, %v2784
        %v2798 = vcombine.low %v2759, %v2791
        %v2799 = vcombine.high %v2759, %v2791
        %2801 = vrot.lane.b32.xlu0 %v2793, 16
        %v2802 = vpop.permute.xlu0 %2801
        %2805 = vrot.lane.b32.xlu0 %v2794, 32
        %v2806 = vpop.permute.xlu0 %2805
        %2809 = vrot.lane.b32.xlu0 %v2795, 48
        %v2810 = vpop.permute.xlu0 %2809
        %2813 = vrot.lane.b32.xlu0 %v2796, 64
        %v2814 = vpop.permute.xlu0 %2813
        %2817 = vrot.lane.b32.xlu0 %v2797, 80
        %v2818 = vpop.permute.xlu0 %2817
        %2821 = vrot.lane.b32.xlu0 %v2798, 96
        %v2822 = vpop.permute.xlu0 %2821
        %2825 = vrot.lane.b32.xlu0 %v2799, 112
        %v2826 = vpop.permute.xlu0 %2825
        %v2828 = vsel %vm1246, %v2792, %v2802
        %vm2829 = vcmask 261120
        %v2830 = vsel %vm2829, %v2828, %v2806
        %vm2831 = vcmask 392192
        %v2832 = vsel %vm2831, %v2830, %v2810
        %vm2833 = vcmask 523264
        %v2834 = vsel %vm2833, %v2832, %v2814
        %vm2835 = vcmask 654336
        %v2836 = vsel %vm2835, %v2834, %v2818
        %vm2837 = vcmask 785408
        %v2838 = vsel %vm2837, %v2836, %v2822
        %vm2839 = vcmask 916480
        %v2840 = vsel %vm2839, %v2838, %v2826
        %2841 = vst [vmem:[%s173] sm:$0xff] %v2840
        %s2842 = sand.u32 %s75, 1
        %s2843 = scalar_lea.sflag [#allocation4], %s2842
        %s2844 = sand.u32 %s75, 1
        %s2845 = smul.addr %s2844, 8
        %s2846 = scalar_lea.vmem [#allocation7], %s2845
        // Predicated region
        $region37: #{tpu_custom_call.1} parent=27 // pred_check
          %p2847 = pneg %p85
        $region38: #{tpu_custom_call.1} parent=27 // pred_check_branch
          %2849 = sbr.rel (%p2847) target = $region40
        $region39: #{tpu_custom_call.1} parent=27 // pred_region
          %s2851 = ssub.s32 128, 128
          %2852 = vsyncadd %s2843, %s2851
          %s2853 = smul.addr %s20, 128
          %s2854 = scalar_lea.hbm %s2, %s2853
          %s2856 = sshll.u32 %s2846, 4
          %s2857 = int_to_ptr.vmem [resolvable:$true] %s2856
          %2859 = dma.vmem_to_hbm [thread:$0]  %s2857, 128, %s2854, %s2843
        $region40: #{tpu_custom_call.1} parent=27 // pred_fallthru
          _
      $region28: #{tpu_custom_call.1} parent=5 // pred_fallthru
        _
      %p2860 = scmp.le.s32.totalorder 2, %s15
      // Predicated region
      $region41: #{tpu_custom_call.1} parent=5 // pred_check
        %p2861 = pneg %p2860
      $region42: #{tpu_custom_call.1} parent=5 // pred_check_branch
        %2863 = sbr.rel (%p2861) target = $region44
      $region43: #{tpu_custom_call.1} parent=5 // pred_region
        %s2864 = ssub.s32 %s15, 2
        // Predicated region
        $region45: #{tpu_custom_call.1} parent=43 // pred_check
          %p2865 = pneg %p91
        $region46: #{tpu_custom_call.1} parent=43 // pred_check_branch
          %2867 = sbr.rel (%p2865) target = $region48
        $region47: #{tpu_custom_call.1} parent=43 // pred_region
          %s2868 = sand.u32 %s76, 1
          %s2869 = scalar_lea.sflag [#allocation4], %s2868
          %s2870 = sand.u32 %s76, 1
          %s2871 = smul.addr %s2870, 8
          %s2872 = scalar_lea.vmem [#allocation7], %s2871
          %2873 = dma.done %s2869, 128
        $region48: #{tpu_custom_call.1} parent=43 // pred_fallthru
          _
      $region44: #{tpu_custom_call.1} parent=5 // pred_fallthru
        _
    $region6: #{tpu_custom_call.1} parent=1 // loop_footer
      %s19 = sadd.s32 1, %s15
    $region7: #{tpu_custom_call.1} parent=1 // loop_footer_branch
      %14 = sbr.rel target = $region3
    $region8: #{tpu_custom_call.1} parent=1 // loop_exit
      _
    %2874 = vsyncpa [#allocation3], 1
    %s2875 = scalar_lea.sflag [#allocation3], 1
    %2876 = vsyncpa %s2875, 1
    %2877 = vsyncpa [#allocation6], 1
    %2878 = vsyncpa [#allocation4], 1
    %s2879 = scalar_lea.sflag [#allocation4], 1
    %2880 = vsyncpa %s2879, 1

</llo_original>
